<compile_context>
chip_gen: v6e
topology: v6e:2x2x1
jax: 0.10.0
libtpu: 0.0.40
codegen_flags: <defaults>
</compile_context>

<pallas_src>
import jax
import jax.numpy as jnp
from jax.experimental import pallas as pl
from jax.experimental.pallas import tpu as pltpu


# ------------------------- Fused forward kernel ------------------------------
def _make_rnn_kernel(T, E, H, L):
    """Fused kernel on the single live batch row:
    (mask*x) -> per-layer batched input projection -> unrolled LSTM recurrence
    (state in vregs) -> Linear."""

    def kernel(*refs):
        x_ref, m_ref = refs[0], refs[1]          # (T, E), (T, 1)
        layer_refs = refs[2:2 + L]               # per-layer weight slabs
        lin_ref = refs[2 + L]                    # (H + 1, H) Linear slab
        out_ref = refs[3 + L]                    # (T, H)

        # Mask multiply hoisted out of the time loop: one VPU op on the block.
        seq = x_ref[...] * m_ref[...]            # (T, E) f32

        for layer in range(L):
            in_dim = E if layer == 0 else H
            slab = layer_refs[layer]             # (in_dim + H + 1, 4H) f32
            # bf16 MXU operands (single-pass matmuls), hoisted out of the loop.
            w_ih = slab[0:in_dim, :].astype(jnp.bfloat16)              # (in_dim, 4H)
            w_hh = slab[in_dim:in_dim + H, :].astype(jnp.bfloat16)     # (H, 4H)
            bias = slab[in_dim + H:in_dim + H + 1, :]                  # (1, 4H) f32

            # Input projection batched over all T steps: one MXU issue per
            # layer; removes the x-matmul + bias add from the serial chain.
            xg = jnp.dot(seq.astype(jnp.bfloat16), w_ih,
                         preferred_element_type=jnp.float32) + bias    # (T, 4H)

            h = jnp.zeros((1, H), jnp.float32)
            c = jnp.zeros((1, H), jnp.float32)
            hs = []
            # T is small & static -> fully unrolled straight-line code; the
            # recurrent state never touches VMEM scratch.
            for t in range(T):
                gates = xg[t:t + 1, :] + jnp.dot(
                    h.astype(jnp.bfloat16), w_hh,
                    preferred_element_type=jnp.float32)                # (1, 4H)
                # Full-width nonlinearities: 2 EUP passes over the whole vreg.
                sg = jax.nn.sigmoid(gates)
                th = jnp.tanh(gates)
                i_g = sg[:, 0 * H:1 * H]       # PyTorch gate order: i, f, g, o
                f_g = sg[:, 1 * H:2 * H]
                g_g = th[:, 2 * H:3 * H]
                o_g = sg[:, 3 * H:4 * H]
                c = f_g * c + i_g * g_g
                h = o_g * jnp.tanh(c)
                hs.append(h)
            seq = jnp.concatenate(hs, axis=0)                          # (T, H)

        # dropout_final is identity in eval mode.
        # TODO(synk): training-mode dropout (scaled Bernoulli mask) not implemented.
        lin_w = lin_ref[0:H, :].astype(jnp.bfloat16)                   # (H, H)
        lin_b = lin_ref[H:H + 1, :]                                    # (1, H)
        out_ref[...] = (
            jnp.dot(seq.astype(jnp.bfloat16), lin_w,
                    preferred_element_type=jnp.float32) + lin_b
        ).astype(out_ref.dtype)

    return kernel


def rnn_forward(x, params, mask=None):
    """x: (T, B, E); mask: (T, B) or None -> (T, H) (then squeeze(1) if H == 1)."""
    T, B, E = x.shape
    H = params["hidden_dim"]
    L = len(params["layer_slabs"])

    # `output[:, -1, :]` on the (T, B, H) LSTM output selects the LAST BATCH
    # row (that is literally what the PyTorch code does); the LSTM is
    # batch-independent, so only row B-1 can reach the output.  Slice it out
    # up front (wrapper-side layout plumbing = dead-work elimination).
    x_last = x[:, B - 1, :]                                    # (T, E)
    if mask is None:
        m_last = jnp.ones((T, 1), jnp.float32)
    else:
        m_last = mask.astype(jnp.float32)[:, B - 1][:, None]   # (T, 1)

    vmem = pl.BlockSpec(memory_space=pltpu.MemorySpace.VMEM)
    out = pl.pallas_call(
        _make_rnn_kernel(T, E, H, L),
        out_shape=jax.ShapeDtypeStruct((T, H), jnp.float32),
        in_specs=[vmem] * (2 + L + 1),
        out_specs=vmem,
    )(x_last, m_last, *params["layer_slabs"], params["lin_slab"])

    # torch .squeeze(1): only squeezes if that dim is 1.
    if out.shape[1] == 1:
        out = out[:, 0]
    return out


# ------------------------- Pure-JAX reference (check) ------------------------
def _ref_forward(x, params, mask=None):
    """Full-batch f32 reference matching the PyTorch module."""
    T, B, E = x.shape
    H = params["hidden_dim"]
    if mask is not None:
        x = x * mask[..., None]
    h_seq = x
    in_dim = E
    for slab in params["layer_slabs"]:
        w_ih = slab[0:in_dim, :]
        w_hh = slab[in_dim:in_dim + H, :]
        bias = slab[in_dim + H, :]

        def step(carry, x_t, w_ih=w_ih, w_hh=w_hh, bias=bias):
            h, c = carry
            g = x_t @ w_ih + h @ w_hh + bias
            i = jax.nn.sigmoid(g[:, 0 * H:1 * H])
            f = jax.nn.sigmoid(g[:, 1 * H:2 * H])
            gg = jnp.tanh(g[:, 2 * H:3 * H])
            o = jax.nn.sigmoid(g[:, 3 * H:4 * H])
            c = f * c + i * gg
            h = o * jnp.tanh(c)
            return (h, c), h

        init = (jnp.zeros((B, H), jnp.float32), jnp.zeros((B, H), jnp.float32))
        _, h_seq = jax.lax.scan(step, init, h_seq)
        in_dim = H
    last = h_seq[:, -1, :]
    return last @ params["lin_slab"][:H, :] + params["lin_slab"][H, :]


# ------------------------------- Param init ----------------------------------
def init_params(key, embedding_dim, hidden_dim, num_layers):
    bound = 1.0 / jnp.sqrt(jnp.float32(hidden_dim))
    slabs = []
    in_dim = embedding_dim
    for _ in range(num_layers):
        key, k1, k2, k3, k4 = jax.random.split(key, 5)
        w_ih = jax.random.uniform(k1, (4 * hidden_dim, in_dim), jnp.float32, -bound, bound)
        w_hh = jax.random.uniform(k2, (4 * hidden_dim, hidden_dim), jnp.float32, -bound, bound)
        b_ih = jax.random.uniform(k3, (4 * hidden_dim,), jnp.float32, -bound, bound)
        b_hh = jax.random.uniform(k4, (4 * hidden_dim,), jnp.float32, -bound, bound)
        # Pack [w_ih^T ; w_hh^T ; (b_ih + b_hh)] into one lane-dense slab
        # (rows, 4H) per layer -> fewer, larger pallas_call operands.
        slab = jnp.concatenate([w_ih.T, w_hh.T, (b_ih + b_hh)[None, :]], axis=0)
        slabs.append(slab)
        in_dim = hidden_dim
    key, k5, k6 = jax.random.split(key, 3)
    lin_w = jax.random.uniform(k5, (hidden_dim, hidden_dim), jnp.float32, -bound, bound)
    lin_b = jax.random.uniform(k6, (hidden_dim,), jnp.float32, -bound, bound)
    lin_slab = jnp.concatenate([lin_w.T, lin_b[None, :]], axis=0)   # (H + 1, H)
    return {"layer_slabs": slabs, "lin_slab": lin_slab, "hidden_dim": hidden_dim}


if __name__ == "__main__":
    # args: embedding_dim=16, hidden_dim=32, num_layers=2, dropout=0.1 (eval)
    T, B, E, H, L = 8, 2, 16, 32, 2

    key = jax.random.PRNGKey(0)
    kx, km, kp = jax.random.split(key, 3)
    x = jax.random.normal(kx, (T, B, E), dtype=jnp.float32)
    mask = (jax.random.uniform(km, (T, B)) > 0.2).astype(jnp.float32)
    params = init_params(kp, E, H, L)

    out = rnn_forward(x, params, mask=mask)
    out = jax.block_until_ready(out)

    ref = _ref_forward(x, params, mask=mask)
    assert out.shape == (T, H), out.shape
    max_err = float(jnp.max(jnp.abs(out - ref)))
    # bf16 MXU operands (f32 accumulation) -> relaxed tolerance vs f32 reference.
    assert jnp.allclose(out, ref, atol=5e-2, rtol=5e-2), max_err

    print("KERNEL_OK")
</pallas_src>

<mosaic_0001>
module attributes {stable_mosaic.version = 11 : i64} {
  func.func @kernel(%arg0: memref<8x16xf32, #tpu.memory_space<vmem>>, %arg1: memref<8x1xf32, #tpu.memory_space<vmem>>, %arg2: memref<49x128xf32, #tpu.memory_space<vmem>>, %arg3: memref<65x128xf32, #tpu.memory_space<vmem>>, %arg4: memref<33x32xf32, #tpu.memory_space<vmem>>, %arg5: memref<8x32xf32, #tpu.memory_space<vmem>>) attributes {dimension_semantics = [], scalar_prefetch = 0 : i64, scratch_operands = 0 : i64, tpu.core_type = #tpu.core_type<tc>} {
    %c0 = arith.constant 0 : index
    %c0_0 = arith.constant 0 : index
    %0 = vector.load %arg0[%c0, %c0_0] : memref<8x16xf32, #tpu.memory_space<vmem>>, vector<8x16xf32>
    %c0_1 = arith.constant 0 : index
    %c0_2 = arith.constant 0 : index
    %1 = vector.load %arg1[%c0_1, %c0_2] : memref<8x1xf32, #tpu.memory_space<vmem>>, vector<8x1xf32>
    %2 = vector.broadcast %1 : vector<8x1xf32> to vector<8x16xf32>
    %3 = arith.mulf %0, %2 : vector<8x16xf32>
    %c0_3 = arith.constant 0 : index
    %c0_4 = arith.constant 0 : index
    %4 = vector.load %arg2[%c0_3, %c0_4] : memref<49x128xf32, #tpu.memory_space<vmem>>, vector<16x128xf32>
    %5 = arith.truncf %4 : vector<16x128xf32> to vector<16x128xbf16>
    %c16 = arith.constant 16 : index
    %c0_5 = arith.constant 0 : index
    %6 = vector.load %arg2[%c16, %c0_5] : memref<49x128xf32, #tpu.memory_space<vmem>>, vector<32x128xf32>
    %7 = arith.truncf %6 : vector<32x128xf32> to vector<32x128xbf16>
    %c48 = arith.constant 48 : index
    %c0_6 = arith.constant 0 : index
    %8 = vector.load %arg2[%c48, %c0_6] : memref<49x128xf32, #tpu.memory_space<vmem>>, vector<1x128xf32>
    %9 = arith.truncf %3 : vector<8x16xf32> to vector<8x16xbf16>
    %cst = arith.constant dense<0.000000e+00> : vector<8x128xf32>
    %10 = tpu.matmul %9, %5, %cst {dimension_numbers = #tpu.dot_dimension_numbers<[1], [0], [0], [1], [0, 0, 1, 1], [], []>} : vector<8x16xbf16>, vector<16x128xbf16>, vector<8x128xf32> -> vector<8x128xf32>
    %11 = vector.broadcast %8 : vector<1x128xf32> to vector<8x128xf32>
    %12 = arith.addf %10, %11 : vector<8x128xf32>
    %cst_7 = arith.constant 0.000000e+00 : f32
    %13 = vector.broadcast %cst_7 : f32 to vector<1x32xf32>
    %cst_8 = arith.constant 0.000000e+00 : f32
    %14 = vector.broadcast %cst_8 : f32 to vector<1x32xf32>
    %15 = vector.extract_strided_slice %12 {offsets = [0, 0], sizes = [1, 128], strides = [1, 1]} : vector<8x128xf32> to vector<1x128xf32>
    %16 = arith.truncf %13 : vector<1x32xf32> to vector<1x32xbf16>
    %cst_9 = arith.constant dense<0.000000e+00> : vector<1x128xf32>
    %17 = tpu.matmul %16, %7, %cst_9 {dimension_numbers = #tpu.dot_dimension_numbers<[1], [0], [0], [1], [0, 0, 1, 1], [], []>} : vector<1x32xbf16>, vector<32x128xbf16>, vector<1x128xf32> -> vector<1x128xf32>
    %18 = arith.addf %15, %17 : vector<1x128xf32>
    %19 = arith.negf %18 : vector<1x128xf32>
    %20 = math.exp %19 : vector<1x128xf32>
    %cst_10 = arith.constant 1.000000e+00 : f32
    %21 = vector.broadcast %cst_10 : f32 to vector<1x128xf32>
    %22 = arith.addf %21, %20 : vector<1x128xf32>
    %23 = arith.divf %21, %22 : vector<1x128xf32>
    %24 = math.tanh %18 : vector<1x128xf32>
    %25 = vector.extract_strided_slice %23 {offsets = [0, 0], sizes = [1, 32], strides = [1, 1]} : vector<1x128xf32> to vector<1x32xf32>
    %26 = vector.extract_strided_slice %23 {offsets = [0, 32], sizes = [1, 32], strides = [1, 1]} : vector<1x128xf32> to vector<1x32xf32>
    %27 = vector.extract_strided_slice %24 {offsets = [0, 64], sizes = [1, 32], strides = [1, 1]} : vector<1x128xf32> to vector<1x32xf32>
    %28 = vector.extract_strided_slice %23 {offsets = [0, 96], sizes = [1, 32], strides = [1, 1]} : vector<1x128xf32> to vector<1x32xf32>
    %29 = arith.mulf %26, %14 : vector<1x32xf32>
    %30 = arith.mulf %25, %27 : vector<1x32xf32>
    %31 = arith.addf %29, %30 : vector<1x32xf32>
    %32 = math.tanh %31 : vector<1x32xf32>
    %33 = arith.mulf %28, %32 : vector<1x32xf32>
    %34 = vector.extract_strided_slice %12 {offsets = [1, 0], sizes = [1, 128], strides = [1, 1]} : vector<8x128xf32> to vector<1x128xf32>
    %35 = arith.truncf %33 : vector<1x32xf32> to vector<1x32xbf16>
    %cst_11 = arith.constant dense<0.000000e+00> : vector<1x128xf32>
    %36 = tpu.matmul %35, %7, %cst_11 {dimension_numbers = #tpu.dot_dimension_numbers<[1], [0], [0], [1], [0, 0, 1, 1], [], []>} : vector<1x32xbf16>, vector<32x128xbf16>, vector<1x128xf32> -> vector<1x128xf32>
    %37 = arith.addf %34, %36 : vector<1x128xf32>
    %38 = arith.negf %37 : vector<1x128xf32>
    %39 = math.exp %38 : vector<1x128xf32>
    %cst_12 = arith.constant 1.000000e+00 : f32
    %40 = vector.broadcast %cst_12 : f32 to vector<1x128xf32>
    %41 = arith.addf %40, %39 : vector<1x128xf32>
    %42 = arith.divf %40, %41 : vector<1x128xf32>
    %43 = math.tanh %37 : vector<1x128xf32>
    %44 = vector.extract_strided_slice %42 {offsets = [0, 0], sizes = [1, 32], strides = [1, 1]} : vector<1x128xf32> to vector<1x32xf32>
    %45 = vector.extract_strided_slice %42 {offsets = [0, 32], sizes = [1, 32], strides = [1, 1]} : vector<1x128xf32> to vector<1x32xf32>
    %46 = vector.extract_strided_slice %43 {offsets = [0, 64], sizes = [1, 32], strides = [1, 1]} : vector<1x128xf32> to vector<1x32xf32>
    %47 = vector.extract_strided_slice %42 {offsets = [0, 96], sizes = [1, 32], strides = [1, 1]} : vector<1x128xf32> to vector<1x32xf32>
    %48 = arith.mulf %45, %31 : vector<1x32xf32>
    %49 = arith.mulf %44, %46 : vector<1x32xf32>
    %50 = arith.addf %48, %49 : vector<1x32xf32>
    %51 = math.tanh %50 : vector<1x32xf32>
    %52 = arith.mulf %47, %51 : vector<1x32xf32>
    %53 = vector.extract_strided_slice %12 {offsets = [2, 0], sizes = [1, 128], strides = [1, 1]} : vector<8x128xf32> to vector<1x128xf32>
    %54 = arith.truncf %52 : vector<1x32xf32> to vector<1x32xbf16>
    %cst_13 = arith.constant dense<0.000000e+00> : vector<1x128xf32>
    %55 = tpu.matmul %54, %7, %cst_13 {dimension_numbers = #tpu.dot_dimension_numbers<[1], [0], [0], [1], [0, 0, 1, 1], [], []>} : vector<1x32xbf16>, vector<32x128xbf16>, vector<1x128xf32> -> vector<1x128xf32>
    %56 = arith.addf %53, %55 : vector<1x128xf32>
    %57 = arith.negf %56 : vector<1x128xf32>
    %58 = math.exp %57 : vector<1x128xf32>
    %cst_14 = arith.constant 1.000000e+00 : f32
    %59 = vector.broadcast %cst_14 : f32 to vector<1x128xf32>
    %60 = arith.addf %59, %58 : vector<1x128xf32>
    %61 = arith.divf %59, %60 : vector<1x128xf32>
    %62 = math.tanh %56 : vector<1x128xf32>
    %63 = vector.extract_strided_slice %61 {offsets = [0, 0], sizes = [1, 32], strides = [1, 1]} : vector<1x128xf32> to vector<1x32xf32>
    %64 = vector.extract_strided_slice %61 {offsets = [0, 32], sizes = [1, 32], strides = [1, 1]} : vector<1x128xf32> to vector<1x32xf32>
    %65 = vector.extract_strided_slice %62 {offsets = [0, 64], sizes = [1, 32], strides = [1, 1]} : vector<1x128xf32> to vector<1x32xf32>
    %66 = vector.extract_strided_slice %61 {offsets = [0, 96], sizes = [1, 32], strides = [1, 1]} : vector<1x128xf32> to vector<1x32xf32>
    %67 = arith.mulf %64, %50 : vector<1x32xf32>
    %68 = arith.mulf %63, %65 : vector<1x32xf32>
    %69 = arith.addf %67, %68 : vector<1x32xf32>
    %70 = math.tanh %69 : vector<1x32xf32>
    %71 = arith.mulf %66, %70 : vector<1x32xf32>
    %72 = vector.extract_strided_slice %12 {offsets = [3, 0], sizes = [1, 128], strides = [1, 1]} : vector<8x128xf32> to vector<1x128xf32>
    %73 = arith.truncf %71 : vector<1x32xf32> to vector<1x32xbf16>
    %cst_15 = arith.constant dense<0.000000e+00> : vector<1x128xf32>
    %74 = tpu.matmul %73, %7, %cst_15 {dimension_numbers = #tpu.dot_dimension_numbers<[1], [0], [0], [1], [0, 0, 1, 1], [], []>} : vector<1x32xbf16>, vector<32x128xbf16>, vector<1x128xf32> -> vector<1x128xf32>
    %75 = arith.addf %72, %74 : vector<1x128xf32>
    %76 = arith.negf %75 : vector<1x128xf32>
    %77 = math.exp %76 : vector<1x128xf32>
    %cst_16 = arith.constant 1.000000e+00 : f32
    %78 = vector.broadcast %cst_16 : f32 to vector<1x128xf32>
    %79 = arith.addf %78, %77 : vector<1x128xf32>
    %80 = arith.divf %78, %79 : vector<1x128xf32>
    %81 = math.tanh %75 : vector<1x128xf32>
    %82 = vector.extract_strided_slice %80 {offsets = [0, 0], sizes = [1, 32], strides = [1, 1]} : vector<1x128xf32> to vector<1x32xf32>
    %83 = vector.extract_strided_slice %80 {offsets = [0, 32], sizes = [1, 32], strides = [1, 1]} : vector<1x128xf32> to vector<1x32xf32>
    %84 = vector.extract_strided_slice %81 {offsets = [0, 64], sizes = [1, 32], strides = [1, 1]} : vector<1x128xf32> to vector<1x32xf32>
    %85 = vector.extract_strided_slice %80 {offsets = [0, 96], sizes = [1, 32], strides = [1, 1]} : vector<1x128xf32> to vector<1x32xf32>
    %86 = arith.mulf %83, %69 : vector<1x32xf32>
    %87 = arith.mulf %82, %84 : vector<1x32xf32>
    %88 = arith.addf %86, %87 : vector<1x32xf32>
    %89 = math.tanh %88 : vector<1x32xf32>
    %90 = arith.mulf %85, %89 : vector<1x32xf32>
    %91 = vector.extract_strided_slice %12 {offsets = [4, 0], sizes = [1, 128], strides = [1, 1]} : vector<8x128xf32> to vector<1x128xf32>
    %92 = arith.truncf %90 : vector<1x32xf32> to vector<1x32xbf16>
    %cst_17 = arith.constant dense<0.000000e+00> : vector<1x128xf32>
    %93 = tpu.matmul %92, %7, %cst_17 {dimension_numbers = #tpu.dot_dimension_numbers<[1], [0], [0], [1], [0, 0, 1, 1], [], []>} : vector<1x32xbf16>, vector<32x128xbf16>, vector<1x128xf32> -> vector<1x128xf32>
    %94 = arith.addf %91, %93 : vector<1x128xf32>
    %95 = arith.negf %94 : vector<1x128xf32>
    %96 = math.exp %95 : vector<1x128xf32>
    %cst_18 = arith.constant 1.000000e+00 : f32
    %97 = vector.broadcast %cst_18 : f32 to vector<1x128xf32>
    %98 = arith.addf %97, %96 : vector<1x128xf32>
    %99 = arith.divf %97, %98 : vector<1x128xf32>
    %100 = math.tanh %94 : vector<1x128xf32>
    %101 = vector.extract_strided_slice %99 {offsets = [0, 0], sizes = [1, 32], strides = [1, 1]} : vector<1x128xf32> to vector<1x32xf32>
    %102 = vector.extract_strided_slice %99 {offsets = [0, 32], sizes = [1, 32], strides = [1, 1]} : vector<1x128xf32> to vector<1x32xf32>
    %103 = vector.extract_strided_slice %100 {offsets = [0, 64], sizes = [1, 32], strides = [1, 1]} : vector<1x128xf32> to vector<1x32xf32>
    %104 = vector.extract_strided_slice %99 {offsets = [0, 96], sizes = [1, 32], strides = [1, 1]} : vector<1x128xf32> to vector<1x32xf32>
    %105 = arith.mulf %102, %88 : vector<1x32xf32>
    %106 = arith.mulf %101, %103 : vector<1x32xf32>
    %107 = arith.addf %105, %106 : vector<1x32xf32>
    %108 = math.tanh %107 : vector<1x32xf32>
    %109 = arith.mulf %104, %108 : vector<1x32xf32>
    %110 = vector.extract_strided_slice %12 {offsets = [5, 0], sizes = [1, 128], strides = [1, 1]} : vector<8x128xf32> to vector<1x128xf32>
    %111 = arith.truncf %109 : vector<1x32xf32> to vector<1x32xbf16>
    %cst_19 = arith.constant dense<0.000000e+00> : vector<1x128xf32>
    %112 = tpu.matmul %111, %7, %cst_19 {dimension_numbers = #tpu.dot_dimension_numbers<[1], [0], [0], [1], [0, 0, 1, 1], [], []>} : vector<1x32xbf16>, vector<32x128xbf16>, vector<1x128xf32> -> vector<1x128xf32>
    %113 = arith.addf %110, %112 : vector<1x128xf32>
    %114 = arith.negf %113 : vector<1x128xf32>
    %115 = math.exp %114 : vector<1x128xf32>
    %cst_20 = arith.constant 1.000000e+00 : f32
    %116 = vector.broadcast %cst_20 : f32 to vector<1x128xf32>
    %117 = arith.addf %116, %115 : vector<1x128xf32>
    %118 = arith.divf %116, %117 : vector<1x128xf32>
    %119 = math.tanh %113 : vector<1x128xf32>
    %120 = vector.extract_strided_slice %118 {offsets = [0, 0], sizes = [1, 32], strides = [1, 1]} : vector<1x128xf32> to vector<1x32xf32>
    %121 = vector.extract_strided_slice %118 {offsets = [0, 32], sizes = [1, 32], strides = [1, 1]} : vector<1x128xf32> to vector<1x32xf32>
    %122 = vector.extract_strided_slice %119 {offsets = [0, 64], sizes = [1, 32], strides = [1, 1]} : vector<1x128xf32> to vector<1x32xf32>
    %123 = vector.extract_strided_slice %118 {offsets = [0, 96], sizes = [1, 32], strides = [1, 1]} : vector<1x128xf32> to vector<1x32xf32>
    %124 = arith.mulf %121, %107 : vector<1x32xf32>
    %125 = arith.mulf %120, %122 : vector<1x32xf32>
    %126 = arith.addf %124, %125 : vector<1x32xf32>
    %127 = math.tanh %126 : vector<1x32xf32>
    %128 = arith.mulf %123, %127 : vector<1x32xf32>
    %129 = vector.extract_strided_slice %12 {offsets = [6, 0], sizes = [1, 128], strides = [1, 1]} : vector<8x128xf32> to vector<1x128xf32>
    %130 = arith.truncf %128 : vector<1x32xf32> to vector<1x32xbf16>
    %cst_21 = arith.constant dense<0.000000e+00> : vector<1x128xf32>
    %131 = tpu.matmul %130, %7, %cst_21 {dimension_numbers = #tpu.dot_dimension_numbers<[1], [0], [0], [1], [0, 0, 1, 1], [], []>} : vector<1x32xbf16>, vector<32x128xbf16>, vector<1x128xf32> -> vector<1x128xf32>
    %132 = arith.addf %129, %131 : vector<1x128xf32>
    %133 = arith.negf %132 : vector<1x128xf32>
    %134 = math.exp %133 : vector<1x128xf32>
    %cst_22 = arith.constant 1.000000e+00 : f32
    %135 = vector.broadcast %cst_22 : f32 to vector<1x128xf32>
    %136 = arith.addf %135, %134 : vector<1x128xf32>
    %137 = arith.divf %135, %136 : vector<1x128xf32>
    %138 = math.tanh %132 : vector<1x128xf32>
    %139 = vector.extract_strided_slice %137 {offsets = [0, 0], sizes = [1, 32], strides = [1, 1]} : vector<1x128xf32> to vector<1x32xf32>
    %140 = vector.extract_strided_slice %137 {offsets = [0, 32], sizes = [1, 32], strides = [1, 1]} : vector<1x128xf32> to vector<1x32xf32>
    %141 = vector.extract_strided_slice %138 {offsets = [0, 64], sizes = [1, 32], strides = [1, 1]} : vector<1x128xf32> to vector<1x32xf32>
    %142 = vector.extract_strided_slice %137 {offsets = [0, 96], sizes = [1, 32], strides = [1, 1]} : vector<1x128xf32> to vector<1x32xf32>
    %143 = arith.mulf %140, %126 : vector<1x32xf32>
    %144 = arith.mulf %139, %141 : vector<1x32xf32>
    %145 = arith.addf %143, %144 : vector<1x32xf32>
    %146 = math.tanh %145 : vector<1x32xf32>
    %147 = arith.mulf %142, %146 : vector<1x32xf32>
    %148 = vector.extract_strided_slice %12 {offsets = [7, 0], sizes = [1, 128], strides = [1, 1]} : vector<8x128xf32> to vector<1x128xf32>
    %149 = arith.truncf %147 : vector<1x32xf32> to vector<1x32xbf16>
    %cst_23 = arith.constant dense<0.000000e+00> : vector<1x128xf32>
    %150 = tpu.matmul %149, %7, %cst_23 {dimension_numbers = #tpu.dot_dimension_numbers<[1], [0], [0], [1], [0, 0, 1, 1], [], []>} : vector<1x32xbf16>, vector<32x128xbf16>, vector<1x128xf32> -> vector<1x128xf32>
    %151 = arith.addf %148, %150 : vector<1x128xf32>
    %152 = arith.negf %151 : vector<1x128xf32>
    %153 = math.exp %152 : vector<1x128xf32>
    %cst_24 = arith.constant 1.000000e+00 : f32
    %154 = vector.broadcast %cst_24 : f32 to vector<1x128xf32>
    %155 = arith.addf %154, %153 : vector<1x128xf32>
    %156 = arith.divf %154, %155 : vector<1x128xf32>
    %157 = math.tanh %151 : vector<1x128xf32>
    %158 = vector.extract_strided_slice %156 {offsets = [0, 0], sizes = [1, 32], strides = [1, 1]} : vector<1x128xf32> to vector<1x32xf32>
    %159 = vector.extract_strided_slice %156 {offsets = [0, 32], sizes = [1, 32], strides = [1, 1]} : vector<1x128xf32> to vector<1x32xf32>
    %160 = vector.extract_strided_slice %157 {offsets = [0, 64], sizes = [1, 32], strides = [1, 1]} : vector<1x128xf32> to vector<1x32xf32>
    %161 = vector.extract_strided_slice %156 {offsets = [0, 96], sizes = [1, 32], strides = [1, 1]} : vector<1x128xf32> to vector<1x32xf32>
    %162 = arith.mulf %159, %145 : vector<1x32xf32>
    %163 = arith.mulf %158, %160 : vector<1x32xf32>
    %164 = arith.addf %162, %163 : vector<1x32xf32>
    %165 = math.tanh %164 : vector<1x32xf32>
    %166 = arith.mulf %161, %165 : vector<1x32xf32>
    %167 = tpu.concatenate %33, %52, %71, %90, %109, %128, %147, %166 in 0 : vector<1x32xf32>, vector<1x32xf32>, vector<1x32xf32>, vector<1x32xf32>, vector<1x32xf32>, vector<1x32xf32>, vector<1x32xf32>, vector<1x32xf32> -> vector<8x32xf32>
    %c0_25 = arith.constant 0 : index
    %c0_26 = arith.constant 0 : index
    %168 = vector.load %arg3[%c0_25, %c0_26] : memref<65x128xf32, #tpu.memory_space<vmem>>, vector<32x128xf32>
    %169 = arith.truncf %168 : vector<32x128xf32> to vector<32x128xbf16>
    %c32 = arith.constant 32 : index
    %c0_27 = arith.constant 0 : index
    %170 = vector.load %arg3[%c32, %c0_27] : memref<65x128xf32, #tpu.memory_space<vmem>>, vector<32x128xf32>
    %171 = arith.truncf %170 : vector<32x128xf32> to vector<32x128xbf16>
    %c64 = arith.constant 64 : index
    %c0_28 = arith.constant 0 : index
    %172 = vector.load %arg3[%c64, %c0_28] : memref<65x128xf32, #tpu.memory_space<vmem>>, vector<1x128xf32>
    %173 = arith.truncf %167 : vector<8x32xf32> to vector<8x32xbf16>
    %cst_29 = arith.constant dense<0.000000e+00> : vector<8x128xf32>
    %174 = tpu.matmul %173, %169, %cst_29 {dimension_numbers = #tpu.dot_dimension_numbers<[1], [0], [0], [1], [0, 0, 1, 1], [], []>} : vector<8x32xbf16>, vector<32x128xbf16>, vector<8x128xf32> -> vector<8x128xf32>
    %175 = vector.broadcast %172 : vector<1x128xf32> to vector<8x128xf32>
    %176 = arith.addf %174, %175 : vector<8x128xf32>
    %cst_30 = arith.constant 0.000000e+00 : f32
    %177 = vector.broadcast %cst_30 : f32 to vector<1x32xf32>
    %cst_31 = arith.constant 0.000000e+00 : f32
    %178 = vector.broadcast %cst_31 : f32 to vector<1x32xf32>
    %179 = vector.extract_strided_slice %176 {offsets = [0, 0], sizes = [1, 128], strides = [1, 1]} : vector<8x128xf32> to vector<1x128xf32>
    %180 = arith.truncf %177 : vector<1x32xf32> to vector<1x32xbf16>
    %cst_32 = arith.constant dense<0.000000e+00> : vector<1x128xf32>
    %181 = tpu.matmul %180, %171, %cst_32 {dimension_numbers = #tpu.dot_dimension_numbers<[1], [0], [0], [1], [0, 0, 1, 1], [], []>} : vector<1x32xbf16>, vector<32x128xbf16>, vector<1x128xf32> -> vector<1x128xf32>
    %182 = arith.addf %179, %181 : vector<1x128xf32>
    %183 = arith.negf %182 : vector<1x128xf32>
    %184 = math.exp %183 : vector<1x128xf32>
    %cst_33 = arith.constant 1.000000e+00 : f32
    %185 = vector.broadcast %cst_33 : f32 to vector<1x128xf32>
    %186 = arith.addf %185, %184 : vector<1x128xf32>
    %187 = arith.divf %185, %186 : vector<1x128xf32>
    %188 = math.tanh %182 : vector<1x128xf32>
    %189 = vector.extract_strided_slice %187 {offsets = [0, 0], sizes = [1, 32], strides = [1, 1]} : vector<1x128xf32> to vector<1x32xf32>
    %190 = vector.extract_strided_slice %187 {offsets = [0, 32], sizes = [1, 32], strides = [1, 1]} : vector<1x128xf32> to vector<1x32xf32>
    %191 = vector.extract_strided_slice %188 {offsets = [0, 64], sizes = [1, 32], strides = [1, 1]} : vector<1x128xf32> to vector<1x32xf32>
    %192 = vector.extract_strided_slice %187 {offsets = [0, 96], sizes = [1, 32], strides = [1, 1]} : vector<1x128xf32> to vector<1x32xf32>
    %193 = arith.mulf %190, %178 : vector<1x32xf32>
    %194 = arith.mulf %189, %191 : vector<1x32xf32>
    %195 = arith.addf %193, %194 : vector<1x32xf32>
    %196 = math.tanh %195 : vector<1x32xf32>
    %197 = arith.mulf %192, %196 : vector<1x32xf32>
    %198 = vector.extract_strided_slice %176 {offsets = [1, 0], sizes = [1, 128], strides = [1, 1]} : vector<8x128xf32> to vector<1x128xf32>
    %199 = arith.truncf %197 : vector<1x32xf32> to vector<1x32xbf16>
    %cst_34 = arith.constant dense<0.000000e+00> : vector<1x128xf32>
    %200 = tpu.matmul %199, %171, %cst_34 {dimension_numbers = #tpu.dot_dimension_numbers<[1], [0], [0], [1], [0, 0, 1, 1], [], []>} : vector<1x32xbf16>, vector<32x128xbf16>, vector<1x128xf32> -> vector<1x128xf32>
    %201 = arith.addf %198, %200 : vector<1x128xf32>
    %202 = arith.negf %201 : vector<1x128xf32>
    %203 = math.exp %202 : vector<1x128xf32>
    %cst_35 = arith.constant 1.000000e+00 : f32
    %204 = vector.broadcast %cst_35 : f32 to vector<1x128xf32>
    %205 = arith.addf %204, %203 : vector<1x128xf32>
    %206 = arith.divf %204, %205 : vector<1x128xf32>
    %207 = math.tanh %201 : vector<1x128xf32>
    %208 = vector.extract_strided_slice %206 {offsets = [0, 0], sizes = [1, 32], strides = [1, 1]} : vector<1x128xf32> to vector<1x32xf32>
    %209 = vector.extract_strided_slice %206 {offsets = [0, 32], sizes = [1, 32], strides = [1, 1]} : vector<1x128xf32> to vector<1x32xf32>
    %210 = vector.extract_strided_slice %207 {offsets = [0, 64], sizes = [1, 32], strides = [1, 1]} : vector<1x128xf32> to vector<1x32xf32>
    %211 = vector.extract_strided_slice %206 {offsets = [0, 96], sizes = [1, 32], strides = [1, 1]} : vector<1x128xf32> to vector<1x32xf32>
    %212 = arith.mulf %209, %195 : vector<1x32xf32>
    %213 = arith.mulf %208, %210 : vector<1x32xf32>
    %214 = arith.addf %212, %213 : vector<1x32xf32>
    %215 = math.tanh %214 : vector<1x32xf32>
    %216 = arith.mulf %211, %215 : vector<1x32xf32>
    %217 = vector.extract_strided_slice %176 {offsets = [2, 0], sizes = [1, 128], strides = [1, 1]} : vector<8x128xf32> to vector<1x128xf32>
    %218 = arith.truncf %216 : vector<1x32xf32> to vector<1x32xbf16>
    %cst_36 = arith.constant dense<0.000000e+00> : vector<1x128xf32>
    %219 = tpu.matmul %218, %171, %cst_36 {dimension_numbers = #tpu.dot_dimension_numbers<[1], [0], [0], [1], [0, 0, 1, 1], [], []>} : vector<1x32xbf16>, vector<32x128xbf16>, vector<1x128xf32> -> vector<1x128xf32>
    %220 = arith.addf %217, %219 : vector<1x128xf32>
    %221 = arith.negf %220 : vector<1x128xf32>
    %222 = math.exp %221 : vector<1x128xf32>
    %cst_37 = arith.constant 1.000000e+00 : f32
    %223 = vector.broadcast %cst_37 : f32 to vector<1x128xf32>
    %224 = arith.addf %223, %222 : vector<1x128xf32>
    %225 = arith.divf %223, %224 : vector<1x128xf32>
    %226 = math.tanh %220 : vector<1x128xf32>
    %227 = vector.extract_strided_slice %225 {offsets = [0, 0], sizes = [1, 32], strides = [1, 1]} : vector<1x128xf32> to vector<1x32xf32>
    %228 = vector.extract_strided_slice %225 {offsets = [0, 32], sizes = [1, 32], strides = [1, 1]} : vector<1x128xf32> to vector<1x32xf32>
    %229 = vector.extract_strided_slice %226 {offsets = [0, 64], sizes = [1, 32], strides = [1, 1]} : vector<1x128xf32> to vector<1x32xf32>
    %230 = vector.extract_strided_slice %225 {offsets = [0, 96], sizes = [1, 32], strides = [1, 1]} : vector<1x128xf32> to vector<1x32xf32>
    %231 = arith.mulf %228, %214 : vector<1x32xf32>
    %232 = arith.mulf %227, %229 : vector<1x32xf32>
    %233 = arith.addf %231, %232 : vector<1x32xf32>
    %234 = math.tanh %233 : vector<1x32xf32>
    %235 = arith.mulf %230, %234 : vector<1x32xf32>
    %236 = vector.extract_strided_slice %176 {offsets = [3, 0], sizes = [1, 128], strides = [1, 1]} : vector<8x128xf32> to vector<1x128xf32>
    %237 = arith.truncf %235 : vector<1x32xf32> to vector<1x32xbf16>
    %cst_38 = arith.constant dense<0.000000e+00> : vector<1x128xf32>
    %238 = tpu.matmul %237, %171, %cst_38 {dimension_numbers = #tpu.dot_dimension_numbers<[1], [0], [0], [1], [0, 0, 1, 1], [], []>} : vector<1x32xbf16>, vector<32x128xbf16>, vector<1x128xf32> -> vector<1x128xf32>
    %239 = arith.addf %236, %238 : vector<1x128xf32>
    %240 = arith.negf %239 : vector<1x128xf32>
    %241 = math.exp %240 : vector<1x128xf32>
    %cst_39 = arith.constant 1.000000e+00 : f32
    %242 = vector.broadcast %cst_39 : f32 to vector<1x128xf32>
    %243 = arith.addf %242, %241 : vector<1x128xf32>
    %244 = arith.divf %242, %243 : vector<1x128xf32>
    %245 = math.tanh %239 : vector<1x128xf32>
    %246 = vector.extract_strided_slice %244 {offsets = [0, 0], sizes = [1, 32], strides = [1, 1]} : vector<1x128xf32> to vector<1x32xf32>
    %247 = vector.extract_strided_slice %244 {offsets = [0, 32], sizes = [1, 32], strides = [1, 1]} : vector<1x128xf32> to vector<1x32xf32>
    %248 = vector.extract_strided_slice %245 {offsets = [0, 64], sizes = [1, 32], strides = [1, 1]} : vector<1x128xf32> to vector<1x32xf32>
    %249 = vector.extract_strided_slice %244 {offsets = [0, 96], sizes = [1, 32], strides = [1, 1]} : vector<1x128xf32> to vector<1x32xf32>
    %250 = arith.mulf %247, %233 : vector<1x32xf32>
    %251 = arith.mulf %246, %248 : vector<1x32xf32>
    %252 = arith.addf %250, %251 : vector<1x32xf32>
    %253 = math.tanh %252 : vector<1x32xf32>
    %254 = arith.mulf %249, %253 : vector<1x32xf32>
    %255 = vector.extract_strided_slice %176 {offsets = [4, 0], sizes = [1, 128], strides = [1, 1]} : vector<8x128xf32> to vector<1x128xf32>
    %256 = arith.truncf %254 : vector<1x32xf32> to vector<1x32xbf16>
    %cst_40 = arith.constant dense<0.000000e+00> : vector<1x128xf32>
    %257 = tpu.matmul %256, %171, %cst_40 {dimension_numbers = #tpu.dot_dimension_numbers<[1], [0], [0], [1], [0, 0, 1, 1], [], []>} : vector<1x32xbf16>, vector<32x128xbf16>, vector<1x128xf32> -> vector<1x128xf32>
    %258 = arith.addf %255, %257 : vector<1x128xf32>
    %259 = arith.negf %258 : vector<1x128xf32>
    %260 = math.exp %259 : vector<1x128xf32>
    %cst_41 = arith.constant 1.000000e+00 : f32
    %261 = vector.broadcast %cst_41 : f32 to vector<1x128xf32>
    %262 = arith.addf %261, %260 : vector<1x128xf32>
    %263 = arith.divf %261, %262 : vector<1x128xf32>
    %264 = math.tanh %258 : vector<1x128xf32>
    %265 = vector.extract_strided_slice %263 {offsets = [0, 0], sizes = [1, 32], strides = [1, 1]} : vector<1x128xf32> to vector<1x32xf32>
    %266 = vector.extract_strided_slice %263 {offsets = [0, 32], sizes = [1, 32], strides = [1, 1]} : vector<1x128xf32> to vector<1x32xf32>
    %267 = vector.extract_strided_slice %264 {offsets = [0, 64], sizes = [1, 32], strides = [1, 1]} : vector<1x128xf32> to vector<1x32xf32>
    %268 = vector.extract_strided_slice %263 {offsets = [0, 96], sizes = [1, 32], strides = [1, 1]} : vector<1x128xf32> to vector<1x32xf32>
    %269 = arith.mulf %266, %252 : vector<1x32xf32>
    %270 = arith.mulf %265, %267 : vector<1x32xf32>
    %271 = arith.addf %269, %270 : vector<1x32xf32>
    %272 = math.tanh %271 : vector<1x32xf32>
    %273 = arith.mulf %268, %272 : vector<1x32xf32>
    %274 = vector.extract_strided_slice %176 {offsets = [5, 0], sizes = [1, 128], strides = [1, 1]} : vector<8x128xf32> to vector<1x128xf32>
    %275 = arith.truncf %273 : vector<1x32xf32> to vector<1x32xbf16>
    %cst_42 = arith.constant dense<0.000000e+00> : vector<1x128xf32>
    %276 = tpu.matmul %275, %171, %cst_42 {dimension_numbers = #tpu.dot_dimension_numbers<[1], [0], [0], [1], [0, 0, 1, 1], [], []>} : vector<1x32xbf16>, vector<32x128xbf16>, vector<1x128xf32> -> vector<1x128xf32>
    %277 = arith.addf %274, %276 : vector<1x128xf32>
    %278 = arith.negf %277 : vector<1x128xf32>
    %279 = math.exp %278 : vector<1x128xf32>
    %cst_43 = arith.constant 1.000000e+00 : f32
    %280 = vector.broadcast %cst_43 : f32 to vector<1x128xf32>
    %281 = arith.addf %280, %279 : vector<1x128xf32>
    %282 = arith.divf %280, %281 : vector<1x128xf32>
    %283 = math.tanh %277 : vector<1x128xf32>
    %284 = vector.extract_strided_slice %282 {offsets = [0, 0], sizes = [1, 32], strides = [1, 1]} : vector<1x128xf32> to vector<1x32xf32>
    %285 = vector.extract_strided_slice %282 {offsets = [0, 32], sizes = [1, 32], strides = [1, 1]} : vector<1x128xf32> to vector<1x32xf32>
    %286 = vector.extract_strided_slice %283 {offsets = [0, 64], sizes = [1, 32], strides = [1, 1]} : vector<1x128xf32> to vector<1x32xf32>
    %287 = vector.extract_strided_slice %282 {offsets = [0, 96], sizes = [1, 32], strides = [1, 1]} : vector<1x128xf32> to vector<1x32xf32>
    %288 = arith.mulf %285, %271 : vector<1x32xf32>
    %289 = arith.mulf %284, %286 : vector<1x32xf32>
    %290 = arith.addf %288, %289 : vector<1x32xf32>
    %291 = math.tanh %290 : vector<1x32xf32>
    %292 = arith.mulf %287, %291 : vector<1x32xf32>
    %293 = vector.extract_strided_slice %176 {offsets = [6, 0], sizes = [1, 128], strides = [1, 1]} : vector<8x128xf32> to vector<1x128xf32>
    %294 = arith.truncf %292 : vector<1x32xf32> to vector<1x32xbf16>
    %cst_44 = arith.constant dense<0.000000e+00> : vector<1x128xf32>
    %295 = tpu.matmul %294, %171, %cst_44 {dimension_numbers = #tpu.dot_dimension_numbers<[1], [0], [0], [1], [0, 0, 1, 1], [], []>} : vector<1x32xbf16>, vector<32x128xbf16>, vector<1x128xf32> -> vector<1x128xf32>
    %296 = arith.addf %293, %295 : vector<1x128xf32>
    %297 = arith.negf %296 : vector<1x128xf32>
    %298 = math.exp %297 : vector<1x128xf32>
    %cst_45 = arith.constant 1.000000e+00 : f32
    %299 = vector.broadcast %cst_45 : f32 to vector<1x128xf32>
    %300 = arith.addf %299, %298 : vector<1x128xf32>
    %301 = arith.divf %299, %300 : vector<1x128xf32>
    %302 = math.tanh %296 : vector<1x128xf32>
    %303 = vector.extract_strided_slice %301 {offsets = [0, 0], sizes = [1, 32], strides = [1, 1]} : vector<1x128xf32> to vector<1x32xf32>
    %304 = vector.extract_strided_slice %301 {offsets = [0, 32], sizes = [1, 32], strides = [1, 1]} : vector<1x128xf32> to vector<1x32xf32>
    %305 = vector.extract_strided_slice %302 {offsets = [0, 64], sizes = [1, 32], strides = [1, 1]} : vector<1x128xf32> to vector<1x32xf32>
    %306 = vector.extract_strided_slice %301 {offsets = [0, 96], sizes = [1, 32], strides = [1, 1]} : vector<1x128xf32> to vector<1x32xf32>
    %307 = arith.mulf %304, %290 : vector<1x32xf32>
    %308 = arith.mulf %303, %305 : vector<1x32xf32>
    %309 = arith.addf %307, %308 : vector<1x32xf32>
    %310 = math.tanh %309 : vector<1x32xf32>
    %311 = arith.mulf %306, %310 : vector<1x32xf32>
    %312 = vector.extract_strided_slice %176 {offsets = [7, 0], sizes = [1, 128], strides = [1, 1]} : vector<8x128xf32> to vector<1x128xf32>
    %313 = arith.truncf %311 : vector<1x32xf32> to vector<1x32xbf16>
    %cst_46 = arith.constant dense<0.000000e+00> : vector<1x128xf32>
    %314 = tpu.matmul %313, %171, %cst_46 {dimension_numbers = #tpu.dot_dimension_numbers<[1], [0], [0], [1], [0, 0, 1, 1], [], []>} : vector<1x32xbf16>, vector<32x128xbf16>, vector<1x128xf32> -> vector<1x128xf32>
    %315 = arith.addf %312, %314 : vector<1x128xf32>
    %316 = arith.negf %315 : vector<1x128xf32>
    %317 = math.exp %316 : vector<1x128xf32>
    %cst_47 = arith.constant 1.000000e+00 : f32
    %318 = vector.broadcast %cst_47 : f32 to vector<1x128xf32>
    %319 = arith.addf %318, %317 : vector<1x128xf32>
    %320 = arith.divf %318, %319 : vector<1x128xf32>
    %321 = math.tanh %315 : vector<1x128xf32>
    %322 = vector.extract_strided_slice %320 {offsets = [0, 0], sizes = [1, 32], strides = [1, 1]} : vector<1x128xf32> to vector<1x32xf32>
    %323 = vector.extract_strided_slice %320 {offsets = [0, 32], sizes = [1, 32], strides = [1, 1]} : vector<1x128xf32> to vector<1x32xf32>
    %324 = vector.extract_strided_slice %321 {offsets = [0, 64], sizes = [1, 32], strides = [1, 1]} : vector<1x128xf32> to vector<1x32xf32>
    %325 = vector.extract_strided_slice %320 {offsets = [0, 96], sizes = [1, 32], strides = [1, 1]} : vector<1x128xf32> to vector<1x32xf32>
    %326 = arith.mulf %323, %309 : vector<1x32xf32>
    %327 = arith.mulf %322, %324 : vector<1x32xf32>
    %328 = arith.addf %326, %327 : vector<1x32xf32>
    %329 = math.tanh %328 : vector<1x32xf32>
    %330 = arith.mulf %325, %329 : vector<1x32xf32>
    %331 = tpu.concatenate %197, %216, %235, %254, %273, %292, %311, %330 in 0 : vector<1x32xf32>, vector<1x32xf32>, vector<1x32xf32>, vector<1x32xf32>, vector<1x32xf32>, vector<1x32xf32>, vector<1x32xf32>, vector<1x32xf32> -> vector<8x32xf32>
    %c0_48 = arith.constant 0 : index
    %c0_49 = arith.constant 0 : index
    %332 = vector.load %arg4[%c0_48, %c0_49] : memref<33x32xf32, #tpu.memory_space<vmem>>, vector<32x32xf32>
    %333 = arith.truncf %332 : vector<32x32xf32> to vector<32x32xbf16>
    %c32_50 = arith.constant 32 : index
    %c0_51 = arith.constant 0 : index
    %334 = vector.load %arg4[%c32_50, %c0_51] : memref<33x32xf32, #tpu.memory_space<vmem>>, vector<1x32xf32>
    %335 = arith.truncf %331 : vector<8x32xf32> to vector<8x32xbf16>
    %cst_52 = arith.constant dense<0.000000e+00> : vector<8x32xf32>
    %336 = tpu.matmul %335, %333, %cst_52 {dimension_numbers = #tpu.dot_dimension_numbers<[1], [0], [0], [1], [0, 0, 1, 1], [], []>} : vector<8x32xbf16>, vector<32x32xbf16>, vector<8x32xf32> -> vector<8x32xf32>
    %337 = vector.broadcast %334 : vector<1x32xf32> to vector<8x32xf32>
    %338 = arith.addf %336, %337 : vector<8x32xf32>
    %c0_53 = arith.constant 0 : index
    %c0_54 = arith.constant 0 : index
    %339 = vector.load %arg5[%c0_53, %c0_54] : memref<8x32xf32, #tpu.memory_space<vmem>>, vector<8x32xf32>
    tpu.vector_store %arg5[%c0_53, %c0_54], %338 {strides = array<i32>} : memref<8x32xf32, #tpu.memory_space<vmem>>, vector<8x32xf32>,
    return
  }
}

</mosaic_0001>

<llo_original>
// kernel: tpu_custom_call.1
$region0: #{tpu_custom_call.1}
  #allocation0 [shape = 'u32[]', space=smem, size = 0x4, offset = 0x4, fixed_abs, tag = 'smem constant byte address 0x4 - core index']
  #allocation1 [shape = 'u32[144,128]{1,0:T(1,128)}', space=vmem, size = 0x12000, scoped, tag = 'internal scratch']
  %s0 = inlined_call_operand.vmem [shape: f32[8,16], index: 0, kind: input, shape index: {}]
  %s1 = inlined_call_operand.vmem [shape: f32[8,1], index: 1, kind: input, shape index: {}]
  %s2 = inlined_call_operand.hbm [shape: f32[49,128], index: 2, kind: input, shape index: {}]
  %s3 = inlined_call_operand.vmem [shape: f32[65,128], index: 3, kind: input, shape index: {}]
  %s4 = inlined_call_operand.vmem [shape: f32[33,32], index: 4, kind: input, shape index: {}]
  %s5 = inlined_call_operand.hbm [shape: f32[8,32], index: 5, kind: output, shape index: {}]
  %s6 = sld [smem:[#allocation0]]
  $region34: #{tpu_custom_call.1} parent=0
    _
  %s8 = ssub.s32 1, %s6
  %s9 = scalar_select 0, %s8, %s6
  $region1: #{tpu_custom_call.1} parent=0
    #allocation2 [shape = 'u8[28672]{0}', space=vmem, size = 0x7000, scoped, tag = 'input window, operand 2, single buffered']
    #allocation3 [shape = 's32[1]{0}', space=sflag, size = 0x4, scoped, tag = 'scoped memory for tpu_custom_call.1']
    #allocation4 [shape = 's32[1]{0}', space=sflag, size = 0x4, scoped, tag = 'scoped memory for tpu_custom_call.1']
    #allocation5 [shape = 'u8[4096]{0}', space=vmem, size = 0x1000, scoped, tag = 'output window, operand 0, single buffered']
    %10 = vsyncpa [#allocation3], 0
    %11 = vsyncpa [#allocation4], 0
    // Predicated region
    $region2: #{tpu_custom_call.1} parent=1 // pred_check
      _
    $region3: #{tpu_custom_call.1} parent=1 // pred_check_branch
      %13 = sbr.rel (0) target = $region5
    $region4: #{tpu_custom_call.1} parent=1 // pred_region
      _
    $region5: #{tpu_custom_call.1} parent=1 // pred_fallthru
      _
    // Predicated region
    $region6: #{tpu_custom_call.1} parent=1 // pred_check
      _
    $region7: #{tpu_custom_call.1} parent=1 // pred_check_branch
      %15 = sbr.rel (0) target = $region9
    $region8: #{tpu_custom_call.1} parent=1 // pred_region
      _
    $region9: #{tpu_custom_call.1} parent=1 // pred_fallthru
      _
    // Predicated region
    $region10: #{tpu_custom_call.1} parent=1 // pred_check
      _
    $region11: #{tpu_custom_call.1} parent=1 // pred_check_branch
      %17 = sbr.rel (0) target = $region13
    $region12: #{tpu_custom_call.1} parent=1 // pred_region
      %s19 = ssub.s32 896, 896
      %20 = vsyncadd [#allocation3], %s19
      %s21 = sshll.u32 [#allocation2], 4
      %s22 = int_to_ptr.vmem [resolvable:$true] %s21
      %27 = dma.hbm_to_vmem [thread:$0]  %s2, 896, %s22, [#allocation3], 128, 128, 8
    $region13: #{tpu_custom_call.1} parent=1 // pred_fallthru
      _
    // Predicated region
    $region14: #{tpu_custom_call.1} parent=1 // pred_check
      _
    $region15: #{tpu_custom_call.1} parent=1 // pred_check_branch
      %29 = sbr.rel (0) target = $region17
    $region16: #{tpu_custom_call.1} parent=1 // pred_region
      _
    $region17: #{tpu_custom_call.1} parent=1 // pred_fallthru
      _
    // Predicated region
    $region18: #{tpu_custom_call.1} parent=1 // pred_check
      _
    $region19: #{tpu_custom_call.1} parent=1 // pred_check_branch
      %31 = sbr.rel (0) target = $region21
    $region20: #{tpu_custom_call.1} parent=1 // pred_region
      _
    $region21: #{tpu_custom_call.1} parent=1 // pred_fallthru
      _
    // Predicated region
    $region22: #{tpu_custom_call.1} parent=1 // pred_check
      _
    $region23: #{tpu_custom_call.1} parent=1 // pred_check_branch
      %33 = sbr.rel (0) target = $region25
    $region24: #{tpu_custom_call.1} parent=1 // pred_region
      %34 = dma.done [#allocation3], 896
    $region25: #{tpu_custom_call.1} parent=1 // pred_fallthru
      _
    %v36 = vld [vmem:[%s0] sm:$0xff]
    %v37 = vld [vmem:[%s1] sm:$0xff]
    %39 = vset.pattern.permute.xlu0 0
    %40 = vperm.xlu0 %39, %v37
    %v41 = vpop.permute.xlu0 %40
    %v43 = vmul.f32 %v36, %v41
    %v44 = vld [vmem:[#allocation2] sm:$0xff]
    %v45 = vld [vmem:[#allocation2 + $0x8] sm:$0xff]
    %v46 = vpack.c.bf16 %v45, %v44
    %v47 = vld [vmem:[#allocation2 + $0x10] sm:$0xff]
    %v48 = vld [vmem:[#allocation2 + $0x18] sm:$0xff]
    %v49 = vld [vmem:[#allocation2 + $0x20] sm:$0xff]
    %v50 = vld [vmem:[#allocation2 + $0x28] sm:$0xff]
    %v51 = vpack.c.bf16 %v48, %v47
    %v52 = vpack.c.bf16 %v50, %v49
    %v53 = vld [vmem:[#allocation2 + $0x30] sm:$0x1]
    %v54 = vpack.c.bf16 %v43, %v43
    %v55 = vlaneseq
    %v56 = vshrl.u32 %v55, 7
    %v57 = vsub.s32 0, %v56
    %v58 = vrot.slane %v53, %v57
    %vm59 = vcmask 130048
    %v61 = vsel %vm59, %v54, 0
    %63 = vmatprep.subr.bf16.mxu0 0
    %64 = vmatpush1.bf16.msra.mxu0 0
    %65 = vmatprep.subr.bf16.mxu0 0
    %66 = vmatpush1.bf16.msra.mxu0 0
    %67 = vmatprep.subr.bf16.mxu0 0
    %68 = vmatpush1.bf16.msra.mxu0 0
    %69 = vmatprep.subr.bf16.mxu0 0
    %70 = vmatpush1.bf16.msra.mxu0 0
    %71 = vmatprep.subr.bf16.mxu0 0
    %72 = vmatpush1.bf16.msra.mxu0 0
    %73 = vmatprep.subr.bf16.mxu0 0
    %74 = vmatpush1.bf16.msra.mxu0 0
    %75 = vmatprep.subr.bf16.mxu0 0
    %76 = vmatpush1.bf16.msra.mxu0 0
    %77 = vmatprep.subr.bf16.mxu0 0
    %78 = vmatpush1.bf16.msra.mxu0 %v46
    %79 = vmatprep.subr.bf16.mxu0 0
    %80 = vmatpush2.bf16.msra.mxu0 0
    %81 = vmatprep.subr.bf16.mxu0 0
    %82 = vmatpush2.bf16.msra.mxu0 0
    %83 = vmatprep.subr.bf16.mxu0 0
    %84 = vmatpush2.bf16.msra.mxu0 0
    %85 = vmatprep.subr.bf16.mxu0 0
    %86 = vmatpush2.bf16.msra.mxu0 0
    %87 = vmatprep.subr.bf16.mxu0 0
    %88 = vmatpush2.bf16.msra.mxu0 0
    %89 = vmatprep.subr.bf16.mxu0 0
    %90 = vmatpush2.bf16.msra.mxu0 0
    %91 = vmatprep.subr.bf16.mxu0 0
    %92 = vmatpush2.bf16.msra.mxu0 0
    %93 = vmatprep.subr.bf16.mxu0 0
    %94 = vmatpush2.bf16.msra.mxu0 0
    %95 = vmatprep.mubr.bf16.mxu0 0
    %96 = vmatmul.mubr.bf16.gmra.mxu0 %v61
    %v97 = vpop.f32.mrf.mxu0
    %v98 = vadd.f32 %v58, %v97
    %v99 = vpop.f32.mrf.mxu0
    %v100 = vpop.f32.mrf.mxu0
    %v101 = vpop.f32.mrf.mxu0
    %102 = vdwg.mxu0
    %vm103 = vcmask 261120
    %v105 = vsel %vm103, 0, 0
    %107 = vmatprep.subr.bf16.mxu0 0
    %108 = vmatpush1.bf16.msra.mxu0 0
    %109 = vmatprep.subr.bf16.mxu0 0
    %110 = vmatpush1.bf16.msra.mxu0 0
    %111 = vmatprep.subr.bf16.mxu0 0
    %112 = vmatpush1.bf16.msra.mxu0 0
    %113 = vmatprep.subr.bf16.mxu0 0
    %114 = vmatpush1.bf16.msra.mxu0 0
    %115 = vmatprep.subr.bf16.mxu0 0
    %116 = vmatpush1.bf16.msra.mxu0 0
    %117 = vmatprep.subr.bf16.mxu0 0
    %118 = vmatpush1.bf16.msra.mxu0 0
    %119 = vmatprep.subr.bf16.mxu0 0
    %120 = vmatpush1.bf16.msra.mxu0 %v52
    %121 = vmatprep.subr.bf16.mxu0 0
    %122 = vmatpush1.bf16.msra.mxu0 %v51
    %123 = vmatprep.subr.bf16.mxu0 0
    %124 = vmatpush2.bf16.msra.mxu0 0
    %125 = vmatprep.subr.bf16.mxu0 0
    %126 = vmatpush2.bf16.msra.mxu0 0
    %127 = vmatprep.subr.bf16.mxu0 0
    %128 = vmatpush2.bf16.msra.mxu0 0
    %129 = vmatprep.subr.bf16.mxu0 0
    %130 = vmatpush2.bf16.msra.mxu0 0
    %131 = vmatprep.subr.bf16.mxu0 0
    %132 = vmatpush2.bf16.msra.mxu0 0
    %133 = vmatprep.subr.bf16.mxu0 0
    %134 = vmatpush2.bf16.msra.mxu0 0
    %135 = vmatprep.subr.bf16.mxu0 0
    %136 = vmatpush2.bf16.msra.mxu0 0
    %137 = vmatprep.subr.bf16.mxu0 0
    %138 = vmatpush2.bf16.msra.mxu0 0
    %139 = vmatprep.mubr.bf16.mxu0 0
    %140 = vmatmul.mubr.bf16.gmra.mxu0 %v105
    %v141 = vpop.f32.mrf.mxu0
    %v142 = vadd.f32 0.0, %v141
    %v143 = vpop.f32.mrf.mxu0
    %v144 = vpop.f32.mrf.mxu0
    %v145 = vpop.f32.mrf.mxu0
    %146 = vdwg.mxu0
    %v147 = vadd.f32 %v98, %v142
    %v148 = vxor.u32 %v147, 2147483648
    %v149 = vmul.f32 %v148, 1.442695
    %v150 = vpow.pop %v149
    %v151 = vadd.f32 %v150, 1.0
    %v152 = vrcp.pop %v151
    %v153 = vmul.f32 1.0, %v152
    %v154 = vtanh.pop %v147
    %v155 = vmul.f32 %v153, 0.0
    %157 = vrot.lane.b32.xlu0 %v154, 64
    %v158 = vpop.permute.xlu0 %157
    %v160 = vmul.f32 %v153, %v158
    %162 = vrot.lane.b32.xlu0 %v160, 32
    %v163 = vpop.permute.xlu0 %162
    %v165 = vadd.f32 %v155, %v163
    %v166 = vtanh.pop %v165
    %168 = vrot.lane.b32.xlu0 %v166, 64
    %v169 = vpop.permute.xlu0 %168
    %v171 = vmul.f32 %v153, %v169
    %v172 = vpack.c.bf16 %v171, %v171
    %174 = vrot.lane.b32.xlu0 %v172, 32
    %v175 = vpop.permute.xlu0 %174
    %v177 = vsel %vm103, %v175, 0
    %179 = vmatprep.subr.bf16.mxu0 0
    %180 = vmatpush1.bf16.msra.mxu0 0
    %181 = vmatprep.subr.bf16.mxu0 0
    %182 = vmatpush1.bf16.msra.mxu0 0
    %183 = vmatprep.subr.bf16.mxu0 0
    %184 = vmatpush1.bf16.msra.mxu0 0
    %185 = vmatprep.subr.bf16.mxu0 0
    %186 = vmatpush1.bf16.msra.mxu0 0
    %187 = vmatprep.subr.bf16.mxu0 0
    %188 = vmatpush1.bf16.msra.mxu0 0
    %189 = vmatprep.subr.bf16.mxu0 0
    %190 = vmatpush1.bf16.msra.mxu0 0
    %191 = vmatprep.subr.bf16.mxu0 0
    %192 = vmatpush1.bf16.msra.mxu0 %v52
    %193 = vmatprep.subr.bf16.mxu0 0
    %194 = vmatpush1.bf16.msra.mxu0 %v51
    %195 = vmatprep.subr.bf16.mxu0 0
    %196 = vmatpush2.bf16.msra.mxu0 0
    %197 = vmatprep.subr.bf16.mxu0 0
    %198 = vmatpush2.bf16.msra.mxu0 0
    %199 = vmatprep.subr.bf16.mxu0 0
    %200 = vmatpush2.bf16.msra.mxu0 0
    %201 = vmatprep.subr.bf16.mxu0 0
    %202 = vmatpush2.bf16.msra.mxu0 0
    %203 = vmatprep.subr.bf16.mxu0 0
    %204 = vmatpush2.bf16.msra.mxu0 0
    %205 = vmatprep.subr.bf16.mxu0 0
    %206 = vmatpush2.bf16.msra.mxu0 0
    %207 = vmatprep.subr.bf16.mxu0 0
    %208 = vmatpush2.bf16.msra.mxu0 0
    %209 = vmatprep.subr.bf16.mxu0 0
    %210 = vmatpush2.bf16.msra.mxu0 0
    %211 = vmatprep.mubr.bf16.mxu0 0
    %212 = vmatmul.mubr.bf16.gmra.mxu0 %v177
    %v213 = vpop.f32.mrf.mxu0
    %v214 = vadd.f32 0.0, %v213
    %v215 = vpop.f32.mrf.mxu0
    %v216 = vpop.f32.mrf.mxu0
    %v217 = vpop.f32.mrf.mxu0
    %218 = vdwg.mxu0
    %v220 = vrot.slane %v214, 7
    %v222 = vadd.f32 %v98, %v220
    %v223 = vxor.u32 %v222, 2147483648
    %v224 = vmul.f32 %v223, 1.442695
    %v225 = vpow.pop %v224
    %v226 = vadd.f32 %v225, 1.0
    %v227 = vrcp.pop %v226
    %v228 = vmul.f32 1.0, %v227
    %v229 = vtanh.pop %v222
    %v231 = vrot.slane %v165, 7
    %v233 = vmul.f32 %v228, %v231
    %235 = vrot.lane.b32.xlu0 %v229, 64
    %v236 = vpop.permute.xlu0 %235
    %v238 = vmul.f32 %v228, %v236
    %240 = vrot.lane.b32.xlu0 %v238, 32
    %v241 = vpop.permute.xlu0 %240
    %v243 = vadd.f32 %v233, %v241
    %v244 = vtanh.pop %v243
    %246 = vrot.lane.b32.xlu0 %v244, 64
    %v247 = vpop.permute.xlu0 %246
    %v249 = vmul.f32 %v228, %v247
    %v250 = vpack.c.bf16 %v249, %v249
    %v252 = vshrl.u32 %v250, 16
    %254 = vrot.lane.b32.xlu0 %v252, 32
    %v255 = vpop.permute.xlu0 %254
    %v257 = vsel %vm103, %v255, 0
    %259 = vmatprep.subr.bf16.mxu0 0
    %260 = vmatpush1.bf16.msra.mxu0 0
    %261 = vmatprep.subr.bf16.mxu0 0
    %262 = vmatpush1.bf16.msra.mxu0 0
    %263 = vmatprep.subr.bf16.mxu0 0
    %264 = vmatpush1.bf16.msra.mxu0 0
    %265 = vmatprep.subr.bf16.mxu0 0
    %266 = vmatpush1.bf16.msra.mxu0 0
    %267 = vmatprep.subr.bf16.mxu0 0
    %268 = vmatpush1.bf16.msra.mxu0 0
    %269 = vmatprep.subr.bf16.mxu0 0
    %270 = vmatpush1.bf16.msra.mxu0 0
    %271 = vmatprep.subr.bf16.mxu0 0
    %272 = vmatpush1.bf16.msra.mxu0 %v52
    %273 = vmatprep.subr.bf16.mxu0 0
    %274 = vmatpush1.bf16.msra.mxu0 %v51
    %275 = vmatprep.subr.bf16.mxu0 0
    %276 = vmatpush2.bf16.msra.mxu0 0
    %277 = vmatprep.subr.bf16.mxu0 0
    %278 = vmatpush2.bf16.msra.mxu0 0
    %279 = vmatprep.subr.bf16.mxu0 0
    %280 = vmatpush2.bf16.msra.mxu0 0
    %281 = vmatprep.subr.bf16.mxu0 0
    %282 = vmatpush2.bf16.msra.mxu0 0
    %283 = vmatprep.subr.bf16.mxu0 0
    %284 = vmatpush2.bf16.msra.mxu0 0
    %285 = vmatprep.subr.bf16.mxu0 0
    %286 = vmatpush2.bf16.msra.mxu0 0
    %287 = vmatprep.subr.bf16.mxu0 0
    %288 = vmatpush2.bf16.msra.mxu0 0
    %289 = vmatprep.subr.bf16.mxu0 0
    %290 = vmatpush2.bf16.msra.mxu0 0
    %291 = vmatprep.mubr.bf16.mxu0 0
    %292 = vmatmul.mubr.bf16.gmra.mxu0 %v257
    %v293 = vpop.f32.mrf.mxu0
    %v294 = vadd.f32 0.0, %v293
    %v295 = vpop.f32.mrf.mxu0
    %v296 = vpop.f32.mrf.mxu0
    %v297 = vpop.f32.mrf.mxu0
    %298 = vdwg.mxu0
    %v300 = vrot.slane %v294, 6
    %v302 = vadd.f32 %v98, %v300
    %v303 = vxor.u32 %v302, 2147483648
    %v304 = vmul.f32 %v303, 1.442695
    %v305 = vpow.pop %v304
    %v306 = vadd.f32 %v305, 1.0
    %v307 = vrcp.pop %v306
    %v308 = vmul.f32 1.0, %v307
    %v309 = vtanh.pop %v302
    %v311 = vrot.slane %v243, 7
    %v313 = vmul.f32 %v308, %v311
    %315 = vrot.lane.b32.xlu0 %v309, 64
    %v316 = vpop.permute.xlu0 %315
    %v318 = vmul.f32 %v308, %v316
    %320 = vrot.lane.b32.xlu0 %v318, 32
    %v321 = vpop.permute.xlu0 %320
    %v323 = vadd.f32 %v313, %v321
    %v324 = vtanh.pop %v323
    %326 = vrot.lane.b32.xlu0 %v324, 64
    %v327 = vpop.permute.xlu0 %326
    %v329 = vmul.f32 %v308, %v327
    %v330 = vpack.c.bf16 %v329, %v329
    %v332 = vrot.slane %v330, 1
    %333 = vrot.lane.b32.xlu0 %v332, 32
    %v334 = vpop.permute.xlu0 %333
    %v336 = vsel %vm103, %v334, 0
    %338 = vmatprep.subr.bf16.mxu0 0
    %339 = vmatpush1.bf16.msra.mxu0 0
    %340 = vmatprep.subr.bf16.mxu0 0
    %341 = vmatpush1.bf16.msra.mxu0 0
    %342 = vmatprep.subr.bf16.mxu0 0
    %343 = vmatpush1.bf16.msra.mxu0 0
    %344 = vmatprep.subr.bf16.mxu0 0
    %345 = vmatpush1.bf16.msra.mxu0 0
    %346 = vmatprep.subr.bf16.mxu0 0
    %347 = vmatpush1.bf16.msra.mxu0 0
    %348 = vmatprep.subr.bf16.mxu0 0
    %349 = vmatpush1.bf16.msra.mxu0 0
    %350 = vmatprep.subr.bf16.mxu0 0
    %351 = vmatpush1.bf16.msra.mxu0 %v52
    %352 = vmatprep.subr.bf16.mxu0 0
    %353 = vmatpush1.bf16.msra.mxu0 %v51
    %354 = vmatprep.subr.bf16.mxu0 0
    %355 = vmatpush2.bf16.msra.mxu0 0
    %356 = vmatprep.subr.bf16.mxu0 0
    %357 = vmatpush2.bf16.msra.mxu0 0
    %358 = vmatprep.subr.bf16.mxu0 0
    %359 = vmatpush2.bf16.msra.mxu0 0
    %360 = vmatprep.subr.bf16.mxu0 0
    %361 = vmatpush2.bf16.msra.mxu0 0
    %362 = vmatprep.subr.bf16.mxu0 0
    %363 = vmatpush2.bf16.msra.mxu0 0
    %364 = vmatprep.subr.bf16.mxu0 0
    %365 = vmatpush2.bf16.msra.mxu0 0
    %366 = vmatprep.subr.bf16.mxu0 0
    %367 = vmatpush2.bf16.msra.mxu0 0
    %368 = vmatprep.subr.bf16.mxu0 0
    %369 = vmatpush2.bf16.msra.mxu0 0
    %370 = vmatprep.mubr.bf16.mxu0 0
    %371 = vmatmul.mubr.bf16.gmra.mxu0 %v336
    %v372 = vpop.f32.mrf.mxu0
    %v373 = vadd.f32 0.0, %v372
    %v374 = vpop.f32.mrf.mxu0
    %v375 = vpop.f32.mrf.mxu0
    %v376 = vpop.f32.mrf.mxu0
    %377 = vdwg.mxu0
    %v379 = vrot.slane %v373, 5
    %v381 = vadd.f32 %v98, %v379
    %v382 = vxor.u32 %v381, 2147483648
    %v383 = vmul.f32 %v382, 1.442695
    %v384 = vpow.pop %v383
    %v385 = vadd.f32 %v384, 1.0
    %v386 = vrcp.pop %v385
    %v387 = vmul.f32 1.0, %v386
    %v388 = vtanh.pop %v381
    %v390 = vrot.slane %v323, 7
    %v392 = vmul.f32 %v387, %v390
    %394 = vrot.lane.b32.xlu0 %v388, 64
    %v395 = vpop.permute.xlu0 %394
    %v397 = vmul.f32 %v387, %v395
    %399 = vrot.lane.b32.xlu0 %v397, 32
    %v400 = vpop.permute.xlu0 %399
    %v402 = vadd.f32 %v392, %v400
    %v403 = vtanh.pop %v402
    %405 = vrot.lane.b32.xlu0 %v403, 64
    %v406 = vpop.permute.xlu0 %405
    %v408 = vmul.f32 %v387, %v406
    %v409 = vpack.c.bf16 %v408, %v408
    %v411 = vshrl.u32 %v409, 16
    %v413 = vrot.slane %v411, 1
    %414 = vrot.lane.b32.xlu0 %v413, 32
    %v415 = vpop.permute.xlu0 %414
    %v417 = vsel %vm103, %v415, 0
    %419 = vmatprep.subr.bf16.mxu0 0
    %420 = vmatpush1.bf16.msra.mxu0 0
    %421 = vmatprep.subr.bf16.mxu0 0
    %422 = vmatpush1.bf16.msra.mxu0 0
    %423 = vmatprep.subr.bf16.mxu0 0
    %424 = vmatpush1.bf16.msra.mxu0 0
    %425 = vmatprep.subr.bf16.mxu0 0
    %426 = vmatpush1.bf16.msra.mxu0 0
    %427 = vmatprep.subr.bf16.mxu0 0
    %428 = vmatpush1.bf16.msra.mxu0 0
    %429 = vmatprep.subr.bf16.mxu0 0
    %430 = vmatpush1.bf16.msra.mxu0 0
    %431 = vmatprep.subr.bf16.mxu0 0
    %432 = vmatpush1.bf16.msra.mxu0 %v52
    %433 = vmatprep.subr.bf16.mxu0 0
    %434 = vmatpush1.bf16.msra.mxu0 %v51
    %435 = vmatprep.subr.bf16.mxu0 0
    %436 = vmatpush2.bf16.msra.mxu0 0
    %437 = vmatprep.subr.bf16.mxu0 0
    %438 = vmatpush2.bf16.msra.mxu0 0
    %439 = vmatprep.subr.bf16.mxu0 0
    %440 = vmatpush2.bf16.msra.mxu0 0
    %441 = vmatprep.subr.bf16.mxu0 0
    %442 = vmatpush2.bf16.msra.mxu0 0
    %443 = vmatprep.subr.bf16.mxu0 0
    %444 = vmatpush2.bf16.msra.mxu0 0
    %445 = vmatprep.subr.bf16.mxu0 0
    %446 = vmatpush2.bf16.msra.mxu0 0
    %447 = vmatprep.subr.bf16.mxu0 0
    %448 = vmatpush2.bf16.msra.mxu0 0
    %449 = vmatprep.subr.bf16.mxu0 0
    %450 = vmatpush2.bf16.msra.mxu0 0
    %451 = vmatprep.mubr.bf16.mxu0 0
    %452 = vmatmul.mubr.bf16.gmra.mxu0 %v417
    %v453 = vpop.f32.mrf.mxu0
    %v454 = vadd.f32 0.0, %v453
    %v455 = vpop.f32.mrf.mxu0
    %v456 = vpop.f32.mrf.mxu0
    %v457 = vpop.f32.mrf.mxu0
    %458 = vdwg.mxu0
    %v460 = vrot.slane %v454, 4
    %v462 = vadd.f32 %v98, %v460
    %v463 = vxor.u32 %v462, 2147483648
    %v464 = vmul.f32 %v463, 1.442695
    %v465 = vpow.pop %v464
    %v466 = vadd.f32 %v465, 1.0
    %v467 = vrcp.pop %v466
    %v468 = vmul.f32 1.0, %v467
    %v469 = vtanh.pop %v462
    %v471 = vrot.slane %v402, 7
    %v473 = vmul.f32 %v468, %v471
    %475 = vrot.lane.b32.xlu0 %v469, 64
    %v476 = vpop.permute.xlu0 %475
    %v478 = vmul.f32 %v468, %v476
    %480 = vrot.lane.b32.xlu0 %v478, 32
    %v481 = vpop.permute.xlu0 %480
    %v483 = vadd.f32 %v473, %v481
    %v484 = vtanh.pop %v483
    %486 = vrot.lane.b32.xlu0 %v484, 64
    %v487 = vpop.permute.xlu0 %486
    %v489 = vmul.f32 %v468, %v487
    %v490 = vpack.c.bf16 %v489, %v489
    %v492 = vrot.slane %v490, 2
    %493 = vrot.lane.b32.xlu0 %v492, 32
    %v494 = vpop.permute.xlu0 %493
    %v496 = vsel %vm103, %v494, 0
    %498 = vmatprep.subr.bf16.mxu0 0
    %499 = vmatpush1.bf16.msra.mxu0 0
    %500 = vmatprep.subr.bf16.mxu0 0
    %501 = vmatpush1.bf16.msra.mxu0 0
    %502 = vmatprep.subr.bf16.mxu0 0
    %503 = vmatpush1.bf16.msra.mxu0 0
    %504 = vmatprep.subr.bf16.mxu0 0
    %505 = vmatpush1.bf16.msra.mxu0 0
    %506 = vmatprep.subr.bf16.mxu0 0
    %507 = vmatpush1.bf16.msra.mxu0 0
    %508 = vmatprep.subr.bf16.mxu0 0
    %509 = vmatpush1.bf16.msra.mxu0 0
    %510 = vmatprep.subr.bf16.mxu0 0
    %511 = vmatpush1.bf16.msra.mxu0 %v52
    %512 = vmatprep.subr.bf16.mxu0 0
    %513 = vmatpush1.bf16.msra.mxu0 %v51
    %514 = vmatprep.subr.bf16.mxu0 0
    %515 = vmatpush2.bf16.msra.mxu0 0
    %516 = vmatprep.subr.bf16.mxu0 0
    %517 = vmatpush2.bf16.msra.mxu0 0
    %518 = vmatprep.subr.bf16.mxu0 0
    %519 = vmatpush2.bf16.msra.mxu0 0
    %520 = vmatprep.subr.bf16.mxu0 0
    %521 = vmatpush2.bf16.msra.mxu0 0
    %522 = vmatprep.subr.bf16.mxu0 0
    %523 = vmatpush2.bf16.msra.mxu0 0
    %524 = vmatprep.subr.bf16.mxu0 0
    %525 = vmatpush2.bf16.msra.mxu0 0
    %526 = vmatprep.subr.bf16.mxu0 0
    %527 = vmatpush2.bf16.msra.mxu0 0
    %528 = vmatprep.subr.bf16.mxu0 0
    %529 = vmatpush2.bf16.msra.mxu0 0
    %530 = vmatprep.mubr.bf16.mxu0 0
    %531 = vmatmul.mubr.bf16.gmra.mxu0 %v496
    %v532 = vpop.f32.mrf.mxu0
    %v533 = vadd.f32 0.0, %v532
    %v534 = vpop.f32.mrf.mxu0
    %v535 = vpop.f32.mrf.mxu0
    %v536 = vpop.f32.mrf.mxu0
    %537 = vdwg.mxu0
    %v539 = vrot.slane %v533, 3
    %v541 = vadd.f32 %v98, %v539
    %v542 = vxor.u32 %v541, 2147483648
    %v543 = vmul.f32 %v542, 1.442695
    %v544 = vpow.pop %v543
    %v545 = vadd.f32 %v544, 1.0
    %v546 = vrcp.pop %v545
    %v547 = vmul.f32 1.0, %v546
    %v548 = vtanh.pop %v541
    %v550 = vrot.slane %v483, 7
    %v552 = vmul.f32 %v547, %v550
    %554 = vrot.lane.b32.xlu0 %v548, 64
    %v555 = vpop.permute.xlu0 %554
    %v557 = vmul.f32 %v547, %v555
    %559 = vrot.lane.b32.xlu0 %v557, 32
    %v560 = vpop.permute.xlu0 %559
    %v562 = vadd.f32 %v552, %v560
    %v563 = vtanh.pop %v562
    %565 = vrot.lane.b32.xlu0 %v563, 64
    %v566 = vpop.permute.xlu0 %565
    %v568 = vmul.f32 %v547, %v566
    %v569 = vpack.c.bf16 %v568, %v568
    %v571 = vshrl.u32 %v569, 16
    %v573 = vrot.slane %v571, 2
    %574 = vrot.lane.b32.xlu0 %v573, 32
    %v575 = vpop.permute.xlu0 %574
    %v577 = vsel %vm103, %v575, 0
    %579 = vmatprep.subr.bf16.mxu0 0
    %580 = vmatpush1.bf16.msra.mxu0 0
    %581 = vmatprep.subr.bf16.mxu0 0
    %582 = vmatpush1.bf16.msra.mxu0 0
    %583 = vmatprep.subr.bf16.mxu0 0
    %584 = vmatpush1.bf16.msra.mxu0 0
    %585 = vmatprep.subr.bf16.mxu0 0
    %586 = vmatpush1.bf16.msra.mxu0 0
    %587 = vmatprep.subr.bf16.mxu0 0
    %588 = vmatpush1.bf16.msra.mxu0 0
    %589 = vmatprep.subr.bf16.mxu0 0
    %590 = vmatpush1.bf16.msra.mxu0 0
    %591 = vmatprep.subr.bf16.mxu0 0
    %592 = vmatpush1.bf16.msra.mxu0 %v52
    %593 = vmatprep.subr.bf16.mxu0 0
    %594 = vmatpush1.bf16.msra.mxu0 %v51
    %595 = vmatprep.subr.bf16.mxu0 0
    %596 = vmatpush2.bf16.msra.mxu0 0
    %597 = vmatprep.subr.bf16.mxu0 0
    %598 = vmatpush2.bf16.msra.mxu0 0
    %599 = vmatprep.subr.bf16.mxu0 0
    %600 = vmatpush2.bf16.msra.mxu0 0
    %601 = vmatprep.subr.bf16.mxu0 0
    %602 = vmatpush2.bf16.msra.mxu0 0
    %603 = vmatprep.subr.bf16.mxu0 0
    %604 = vmatpush2.bf16.msra.mxu0 0
    %605 = vmatprep.subr.bf16.mxu0 0
    %606 = vmatpush2.bf16.msra.mxu0 0
    %607 = vmatprep.subr.bf16.mxu0 0
    %608 = vmatpush2.bf16.msra.mxu0 0
    %609 = vmatprep.subr.bf16.mxu0 0
    %610 = vmatpush2.bf16.msra.mxu0 0
    %611 = vmatprep.mubr.bf16.mxu0 0
    %612 = vmatmul.mubr.bf16.gmra.mxu0 %v577
    %v613 = vpop.f32.mrf.mxu0
    %v614 = vadd.f32 0.0, %v613
    %v615 = vpop.f32.mrf.mxu0
    %v616 = vpop.f32.mrf.mxu0
    %v617 = vpop.f32.mrf.mxu0
    %618 = vdwg.mxu0
    %v620 = vrot.slane %v614, 2
    %v622 = vadd.f32 %v98, %v620
    %v623 = vxor.u32 %v622, 2147483648
    %v624 = vmul.f32 %v623, 1.442695
    %v625 = vpow.pop %v624
    %v626 = vadd.f32 %v625, 1.0
    %v627 = vrcp.pop %v626
    %v628 = vmul.f32 1.0, %v627
    %v629 = vtanh.pop %v622
    %v631 = vrot.slane %v562, 7
    %v633 = vmul.f32 %v628, %v631
    %635 = vrot.lane.b32.xlu0 %v629, 64
    %v636 = vpop.permute.xlu0 %635
    %v638 = vmul.f32 %v628, %v636
    %640 = vrot.lane.b32.xlu0 %v638, 32
    %v641 = vpop.permute.xlu0 %640
    %v643 = vadd.f32 %v633, %v641
    %v644 = vtanh.pop %v643
    %646 = vrot.lane.b32.xlu0 %v644, 64
    %v647 = vpop.permute.xlu0 %646
    %v649 = vmul.f32 %v628, %v647
    %v650 = vpack.c.bf16 %v649, %v649
    %v652 = vrot.slane %v650, 3
    %653 = vrot.lane.b32.xlu0 %v652, 32
    %v654 = vpop.permute.xlu0 %653
    %v656 = vsel %vm103, %v654, 0
    %658 = vmatprep.subr.bf16.mxu0 0
    %659 = vmatpush1.bf16.msra.mxu0 0
    %660 = vmatprep.subr.bf16.mxu0 0
    %661 = vmatpush1.bf16.msra.mxu0 0
    %662 = vmatprep.subr.bf16.mxu0 0
    %663 = vmatpush1.bf16.msra.mxu0 0
    %664 = vmatprep.subr.bf16.mxu0 0
    %665 = vmatpush1.bf16.msra.mxu0 0
    %666 = vmatprep.subr.bf16.mxu0 0
    %667 = vmatpush1.bf16.msra.mxu0 0
    %668 = vmatprep.subr.bf16.mxu0 0
    %669 = vmatpush1.bf16.msra.mxu0 0
    %670 = vmatprep.subr.bf16.mxu0 0
    %671 = vmatpush1.bf16.msra.mxu0 %v52
    %672 = vmatprep.subr.bf16.mxu0 0
    %673 = vmatpush1.bf16.msra.mxu0 %v51
    %674 = vmatprep.subr.bf16.mxu0 0
    %675 = vmatpush2.bf16.msra.mxu0 0
    %676 = vmatprep.subr.bf16.mxu0 0
    %677 = vmatpush2.bf16.msra.mxu0 0
    %678 = vmatprep.subr.bf16.mxu0 0
    %679 = vmatpush2.bf16.msra.mxu0 0
    %680 = vmatprep.subr.bf16.mxu0 0
    %681 = vmatpush2.bf16.msra.mxu0 0
    %682 = vmatprep.subr.bf16.mxu0 0
    %683 = vmatpush2.bf16.msra.mxu0 0
    %684 = vmatprep.subr.bf16.mxu0 0
    %685 = vmatpush2.bf16.msra.mxu0 0
    %686 = vmatprep.subr.bf16.mxu0 0
    %687 = vmatpush2.bf16.msra.mxu0 0
    %688 = vmatprep.subr.bf16.mxu0 0
    %689 = vmatpush2.bf16.msra.mxu0 0
    %690 = vmatprep.mubr.bf16.mxu0 0
    %691 = vmatmul.mubr.bf16.gmra.mxu0 %v656
    %v692 = vpop.f32.mrf.mxu0
    %v693 = vadd.f32 0.0, %v692
    %v694 = vpop.f32.mrf.mxu0
    %v695 = vpop.f32.mrf.mxu0
    %v696 = vpop.f32.mrf.mxu0
    %697 = vdwg.mxu0
    %v699 = vrot.slane %v693, 1
    %v701 = vadd.f32 %v98, %v699
    %v702 = vxor.u32 %v701, 2147483648
    %v703 = vmul.f32 %v702, 1.442695
    %v704 = vpow.pop %v703
    %v705 = vadd.f32 %v704, 1.0
    %v706 = vrcp.pop %v705
    %v707 = vmul.f32 1.0, %v706
    %v708 = vtanh.pop %v701
    %v710 = vrot.slane %v643, 7
    %v712 = vmul.f32 %v707, %v710
    %714 = vrot.lane.b32.xlu0 %v708, 64
    %v715 = vpop.permute.xlu0 %714
    %v717 = vmul.f32 %v707, %v715
    %719 = vrot.lane.b32.xlu0 %v717, 32
    %v720 = vpop.permute.xlu0 %719
    %v722 = vadd.f32 %v712, %v720
    %v723 = vtanh.pop %v722
    %725 = vrot.lane.b32.xlu0 %v723, 64
    %v726 = vpop.permute.xlu0 %725
    %v728 = vmul.f32 %v707, %v726
    %vm729 = vcmask 1040384
    %v730 = vsel %vm729, %v171, %v249
    %vm731 = vcmask 1041408
    %v732 = vsel %vm731, %v730, %v329
    %vm733 = vcmask 1042432
    %v734 = vsel %vm733, %v732, %v408
    %vm735 = vcmask 1043456
    %v736 = vsel %vm735, %v734, %v489
    %vm737 = vcmask 1044480
    %v738 = vsel %vm737, %v736, %v568
    %vm739 = vcmask 1045504
    %v740 = vsel %vm739, %v738, %v649
    %vm741 = vcmask 1046528
    %v742 = vsel %vm741, %v740, %v728
    %v743 = vld [vmem:[%s3] sm:$0xff]
    %v744 = vld [vmem:[%s3 + $0x8] sm:$0xff]
    %v745 = vld [vmem:[%s3 + $0x10] sm:$0xff]
    %v746 = vld [vmem:[%s3 + $0x18] sm:$0xff]
    %v747 = vpack.c.bf16 %v744, %v743
    %v748 = vpack.c.bf16 %v746, %v745
    %v749 = vld [vmem:[%s3 + $0x20] sm:$0xff]
    %v750 = vld [vmem:[%s3 + $0x28] sm:$0xff]
    %v751 = vld [vmem:[%s3 + $0x30] sm:$0xff]
    %v752 = vld [vmem:[%s3 + $0x38] sm:$0xff]
    %v753 = vpack.c.bf16 %v750, %v749
    %v754 = vpack.c.bf16 %v752, %v751
    %v755 = vld [vmem:[%s3 + $0x40] sm:$0x1]
    %v756 = vpack.c.bf16 %v742, %v742
    %v757 = vlaneseq
    %v758 = vshrl.u32 %v757, 7
    %v759 = vsub.s32 0, %v758
    %v760 = vrot.slane %v755, %v759
    %762 = vrot.lane.b32.xlu0 %v756, 32
    %v763 = vpop.permute.xlu0 %762
    %v765 = vsel %vm103, %v763, 0
    %767 = vmatprep.subr.bf16.mxu0 0
    %768 = vmatpush1.bf16.msra.mxu0 0
    %769 = vmatprep.subr.bf16.mxu0 0
    %770 = vmatpush1.bf16.msra.mxu0 0
    %771 = vmatprep.subr.bf16.mxu0 0
    %772 = vmatpush1.bf16.msra.mxu0 0
    %773 = vmatprep.subr.bf16.mxu0 0
    %774 = vmatpush1.bf16.msra.mxu0 0
    %775 = vmatprep.subr.bf16.mxu0 0
    %776 = vmatpush1.bf16.msra.mxu0 0
    %777 = vmatprep.subr.bf16.mxu0 0
    %778 = vmatpush1.bf16.msra.mxu0 0
    %779 = vmatprep.subr.bf16.mxu0 0
    %780 = vmatpush1.bf16.msra.mxu0 %v748
    %781 = vmatprep.subr.bf16.mxu0 0
    %782 = vmatpush1.bf16.msra.mxu0 %v747
    %783 = vmatprep.subr.bf16.mxu0 0
    %784 = vmatpush2.bf16.msra.mxu0 0
    %785 = vmatprep.subr.bf16.mxu0 0
    %786 = vmatpush2.bf16.msra.mxu0 0
    %787 = vmatprep.subr.bf16.mxu0 0
    %788 = vmatpush2.bf16.msra.mxu0 0
    %789 = vmatprep.subr.bf16.mxu0 0
    %790 = vmatpush2.bf16.msra.mxu0 0
    %791 = vmatprep.subr.bf16.mxu0 0
    %792 = vmatpush2.bf16.msra.mxu0 0
    %793 = vmatprep.subr.bf16.mxu0 0
    %794 = vmatpush2.bf16.msra.mxu0 0
    %795 = vmatprep.subr.bf16.mxu0 0
    %796 = vmatpush2.bf16.msra.mxu0 0
    %797 = vmatprep.subr.bf16.mxu0 0
    %798 = vmatpush2.bf16.msra.mxu0 0
    %799 = vmatprep.mubr.bf16.mxu0 0
    %800 = vmatmul.mubr.bf16.gmra.mxu0 %v765
    %v801 = vpop.f32.mrf.mxu0
    %v802 = vadd.f32 %v760, %v801
    %v803 = vpop.f32.mrf.mxu0
    %v804 = vpop.f32.mrf.mxu0
    %v805 = vpop.f32.mrf.mxu0
    %806 = vdwg.mxu0
    %807 = vmatprep.subr.bf16.mxu0 0
    %808 = vmatpush1.bf16.msra.mxu0 0
    %809 = vmatprep.subr.bf16.mxu0 0
    %810 = vmatpush1.bf16.msra.mxu0 0
    %811 = vmatprep.subr.bf16.mxu0 0
    %812 = vmatpush1.bf16.msra.mxu0 0
    %813 = vmatprep.subr.bf16.mxu0 0
    %814 = vmatpush1.bf16.msra.mxu0 0
    %815 = vmatprep.subr.bf16.mxu0 0
    %816 = vmatpush1.bf16.msra.mxu0 0
    %817 = vmatprep.subr.bf16.mxu0 0
    %818 = vmatpush1.bf16.msra.mxu0 0
    %819 = vmatprep.subr.bf16.mxu0 0
    %820 = vmatpush1.bf16.msra.mxu0 %v754
    %821 = vmatprep.subr.bf16.mxu0 0
    %822 = vmatpush1.bf16.msra.mxu0 %v753
    %823 = vmatprep.subr.bf16.mxu0 0
    %824 = vmatpush2.bf16.msra.mxu0 0
    %825 = vmatprep.subr.bf16.mxu0 0
    %826 = vmatpush2.bf16.msra.mxu0 0
    %827 = vmatprep.subr.bf16.mxu0 0
    %828 = vmatpush2.bf16.msra.mxu0 0
    %829 = vmatprep.subr.bf16.mxu0 0
    %830 = vmatpush2.bf16.msra.mxu0 0
    %831 = vmatprep.subr.bf16.mxu0 0
    %832 = vmatpush2.bf16.msra.mxu0 0
    %833 = vmatprep.subr.bf16.mxu0 0
    %834 = vmatpush2.bf16.msra.mxu0 0
    %835 = vmatprep.subr.bf16.mxu0 0
    %836 = vmatpush2.bf16.msra.mxu0 0
    %837 = vmatprep.subr.bf16.mxu0 0
    %838 = vmatpush2.bf16.msra.mxu0 0
    %839 = vmatprep.mubr.bf16.mxu0 0
    %840 = vmatmul.mubr.bf16.gmra.mxu0 %v105
    %v841 = vpop.f32.mrf.mxu0
    %v842 = vadd.f32 0.0, %v841
    %v843 = vpop.f32.mrf.mxu0
    %v844 = vpop.f32.mrf.mxu0
    %v845 = vpop.f32.mrf.mxu0
    %846 = vdwg.mxu0
    %v847 = vadd.f32 %v802, %v842
    %v848 = vxor.u32 %v847, 2147483648
    %v849 = vmul.f32 %v848, 1.442695
    %v850 = vpow.pop %v849
    %v851 = vadd.f32 %v850, 1.0
    %v852 = vrcp.pop %v851
    %v853 = vmul.f32 1.0, %v852
    %v854 = vtanh.pop %v847
    %v855 = vmul.f32 %v853, 0.0
    %857 = vrot.lane.b32.xlu0 %v854, 64
    %v858 = vpop.permute.xlu0 %857
    %v860 = vmul.f32 %v853, %v858
    %862 = vrot.lane.b32.xlu0 %v860, 32
    %v863 = vpop.permute.xlu0 %862
    %v865 = vadd.f32 %v855, %v863
    %v866 = vtanh.pop %v865
    %868 = vrot.lane.b32.xlu0 %v866, 64
    %v869 = vpop.permute.xlu0 %868
    %v871 = vmul.f32 %v853, %v869
    %v872 = vpack.c.bf16 %v871, %v871
    %874 = vrot.lane.b32.xlu0 %v872, 32
    %v875 = vpop.permute.xlu0 %874
    %v877 = vsel %vm103, %v875, 0
    %879 = vmatprep.subr.bf16.mxu0 0
    %880 = vmatpush1.bf16.msra.mxu0 0
    %881 = vmatprep.subr.bf16.mxu0 0
    %882 = vmatpush1.bf16.msra.mxu0 0
    %883 = vmatprep.subr.bf16.mxu0 0
    %884 = vmatpush1.bf16.msra.mxu0 0
    %885 = vmatprep.subr.bf16.mxu0 0
    %886 = vmatpush1.bf16.msra.mxu0 0
    %887 = vmatprep.subr.bf16.mxu0 0
    %888 = vmatpush1.bf16.msra.mxu0 0
    %889 = vmatprep.subr.bf16.mxu0 0
    %890 = vmatpush1.bf16.msra.mxu0 0
    %891 = vmatprep.subr.bf16.mxu0 0
    %892 = vmatpush1.bf16.msra.mxu0 %v754
    %893 = vmatprep.subr.bf16.mxu0 0
    %894 = vmatpush1.bf16.msra.mxu0 %v753
    %895 = vmatprep.subr.bf16.mxu0 0
    %896 = vmatpush2.bf16.msra.mxu0 0
    %897 = vmatprep.subr.bf16.mxu0 0
    %898 = vmatpush2.bf16.msra.mxu0 0
    %899 = vmatprep.subr.bf16.mxu0 0
    %900 = vmatpush2.bf16.msra.mxu0 0
    %901 = vmatprep.subr.bf16.mxu0 0
    %902 = vmatpush2.bf16.msra.mxu0 0
    %903 = vmatprep.subr.bf16.mxu0 0
    %904 = vmatpush2.bf16.msra.mxu0 0
    %905 = vmatprep.subr.bf16.mxu0 0
    %906 = vmatpush2.bf16.msra.mxu0 0
    %907 = vmatprep.subr.bf16.mxu0 0
    %908 = vmatpush2.bf16.msra.mxu0 0
    %909 = vmatprep.subr.bf16.mxu0 0
    %910 = vmatpush2.bf16.msra.mxu0 0
    %911 = vmatprep.mubr.bf16.mxu0 0
    %912 = vmatmul.mubr.bf16.gmra.mxu0 %v877
    %v913 = vpop.f32.mrf.mxu0
    %v914 = vadd.f32 0.0, %v913
    %v915 = vpop.f32.mrf.mxu0
    %v916 = vpop.f32.mrf.mxu0
    %v917 = vpop.f32.mrf.mxu0
    %918 = vdwg.mxu0
    %v920 = vrot.slane %v914, 7
    %v922 = vadd.f32 %v802, %v920
    %v923 = vxor.u32 %v922, 2147483648
    %v924 = vmul.f32 %v923, 1.442695
    %v925 = vpow.pop %v924
    %v926 = vadd.f32 %v925, 1.0
    %v927 = vrcp.pop %v926
    %v928 = vmul.f32 1.0, %v927
    %v929 = vtanh.pop %v922
    %v931 = vrot.slane %v865, 7
    %v933 = vmul.f32 %v928, %v931
    %935 = vrot.lane.b32.xlu0 %v929, 64
    %v936 = vpop.permute.xlu0 %935
    %v938 = vmul.f32 %v928, %v936
    %940 = vrot.lane.b32.xlu0 %v938, 32
    %v941 = vpop.permute.xlu0 %940
    %v943 = vadd.f32 %v933, %v941
    %v944 = vtanh.pop %v943
    %946 = vrot.lane.b32.xlu0 %v944, 64
    %v947 = vpop.permute.xlu0 %946
    %v949 = vmul.f32 %v928, %v947
    %v950 = vpack.c.bf16 %v949, %v949
    %v952 = vshrl.u32 %v950, 16
    %954 = vrot.lane.b32.xlu0 %v952, 32
    %v955 = vpop.permute.xlu0 %954
    %v957 = vsel %vm103, %v955, 0
    %959 = vmatprep.subr.bf16.mxu0 0
    %960 = vmatpush1.bf16.msra.mxu0 0
    %961 = vmatprep.subr.bf16.mxu0 0
    %962 = vmatpush1.bf16.msra.mxu0 0
    %963 = vmatprep.subr.bf16.mxu0 0
    %964 = vmatpush1.bf16.msra.mxu0 0
    %965 = vmatprep.subr.bf16.mxu0 0
    %966 = vmatpush1.bf16.msra.mxu0 0
    %967 = vmatprep.subr.bf16.mxu0 0
    %968 = vmatpush1.bf16.msra.mxu0 0
    %969 = vmatprep.subr.bf16.mxu0 0
    %970 = vmatpush1.bf16.msra.mxu0 0
    %971 = vmatprep.subr.bf16.mxu0 0
    %972 = vmatpush1.bf16.msra.mxu0 %v754
    %973 = vmatprep.subr.bf16.mxu0 0
    %974 = vmatpush1.bf16.msra.mxu0 %v753
    %975 = vmatprep.subr.bf16.mxu0 0
    %976 = vmatpush2.bf16.msra.mxu0 0
    %977 = vmatprep.subr.bf16.mxu0 0
    %978 = vmatpush2.bf16.msra.mxu0 0
    %979 = vmatprep.subr.bf16.mxu0 0
    %980 = vmatpush2.bf16.msra.mxu0 0
    %981 = vmatprep.subr.bf16.mxu0 0
    %982 = vmatpush2.bf16.msra.mxu0 0
    %983 = vmatprep.subr.bf16.mxu0 0
    %984 = vmatpush2.bf16.msra.mxu0 0
    %985 = vmatprep.subr.bf16.mxu0 0
    %986 = vmatpush2.bf16.msra.mxu0 0
    %987 = vmatprep.subr.bf16.mxu0 0
    %988 = vmatpush2.bf16.msra.mxu0 0
    %989 = vmatprep.subr.bf16.mxu0 0
    %990 = vmatpush2.bf16.msra.mxu0 0
    %991 = vmatprep.mubr.bf16.mxu0 0
    %992 = vmatmul.mubr.bf16.gmra.mxu0 %v957
    %v993 = vpop.f32.mrf.mxu0
    %v994 = vadd.f32 0.0, %v993
    %v995 = vpop.f32.mrf.mxu0
    %v996 = vpop.f32.mrf.mxu0
    %v997 = vpop.f32.mrf.mxu0
    %998 = vdwg.mxu0
    %v1000 = vrot.slane %v994, 6
    %v1002 = vadd.f32 %v802, %v1000
    %v1003 = vxor.u32 %v1002, 2147483648
    %v1004 = vmul.f32 %v1003, 1.442695
    %v1005 = vpow.pop %v1004
    %v1006 = vadd.f32 %v1005, 1.0
    %v1007 = vrcp.pop %v1006
    %v1008 = vmul.f32 1.0, %v1007
    %v1009 = vtanh.pop %v1002
    %v1011 = vrot.slane %v943, 7
    %v1013 = vmul.f32 %v1008, %v1011
    %1015 = vrot.lane.b32.xlu0 %v1009, 64
    %v1016 = vpop.permute.xlu0 %1015
    %v1018 = vmul.f32 %v1008, %v1016
    %1020 = vrot.lane.b32.xlu0 %v1018, 32
    %v1021 = vpop.permute.xlu0 %1020
    %v1023 = vadd.f32 %v1013, %v1021
    %v1024 = vtanh.pop %v1023
    %1026 = vrot.lane.b32.xlu0 %v1024, 64
    %v1027 = vpop.permute.xlu0 %1026
    %v1029 = vmul.f32 %v1008, %v1027
    %v1030 = vpack.c.bf16 %v1029, %v1029
    %v1032 = vrot.slane %v1030, 1
    %1033 = vrot.lane.b32.xlu0 %v1032, 32
    %v1034 = vpop.permute.xlu0 %1033
    %v1036 = vsel %vm103, %v1034, 0
    %1038 = vmatprep.subr.bf16.mxu0 0
    %1039 = vmatpush1.bf16.msra.mxu0 0
    %1040 = vmatprep.subr.bf16.mxu0 0
    %1041 = vmatpush1.bf16.msra.mxu0 0
    %1042 = vmatprep.subr.bf16.mxu0 0
    %1043 = vmatpush1.bf16.msra.mxu0 0
    %1044 = vmatprep.subr.bf16.mxu0 0
    %1045 = vmatpush1.bf16.msra.mxu0 0
    %1046 = vmatprep.subr.bf16.mxu0 0
    %1047 = vmatpush1.bf16.msra.mxu0 0
    %1048 = vmatprep.subr.bf16.mxu0 0
    %1049 = vmatpush1.bf16.msra.mxu0 0
    %1050 = vmatprep.subr.bf16.mxu0 0
    %1051 = vmatpush1.bf16.msra.mxu0 %v754
    %1052 = vmatprep.subr.bf16.mxu0 0
    %1053 = vmatpush1.bf16.msra.mxu0 %v753
    %1054 = vmatprep.subr.bf16.mxu0 0
    %1055 = vmatpush2.bf16.msra.mxu0 0
    %1056 = vmatprep.subr.bf16.mxu0 0
    %1057 = vmatpush2.bf16.msra.mxu0 0
    %1058 = vmatprep.subr.bf16.mxu0 0
    %1059 = vmatpush2.bf16.msra.mxu0 0
    %1060 = vmatprep.subr.bf16.mxu0 0
    %1061 = vmatpush2.bf16.msra.mxu0 0
    %1062 = vmatprep.subr.bf16.mxu0 0
    %1063 = vmatpush2.bf16.msra.mxu0 0
    %1064 = vmatprep.subr.bf16.mxu0 0
    %1065 = vmatpush2.bf16.msra.mxu0 0
    %1066 = vmatprep.subr.bf16.mxu0 0
    %1067 = vmatpush2.bf16.msra.mxu0 0
    %1068 = vmatprep.subr.bf16.mxu0 0
    %1069 = vmatpush2.bf16.msra.mxu0 0
    %1070 = vmatprep.mubr.bf16.mxu0 0
    %1071 = vmatmul.mubr.bf16.gmra.mxu0 %v1036
    %v1072 = vpop.f32.mrf.mxu0
    %v1073 = vadd.f32 0.0, %v1072
    %v1074 = vpop.f32.mrf.mxu0
    %v1075 = vpop.f32.mrf.mxu0
    %v1076 = vpop.f32.mrf.mxu0
    %1077 = vdwg.mxu0
    %v1079 = vrot.slane %v1073, 5
    %v1081 = vadd.f32 %v802, %v1079
    %v1082 = vxor.u32 %v1081, 2147483648
    %v1083 = vmul.f32 %v1082, 1.442695
    %v1084 = vpow.pop %v1083
    %v1085 = vadd.f32 %v1084, 1.0
    %v1086 = vrcp.pop %v1085
    %v1087 = vmul.f32 1.0, %v1086
    %v1088 = vtanh.pop %v1081
    %v1090 = vrot.slane %v1023, 7
    %v1092 = vmul.f32 %v1087, %v1090
    %1094 = vrot.lane.b32.xlu0 %v1088, 64
    %v1095 = vpop.permute.xlu0 %1094
    %v1097 = vmul.f32 %v1087, %v1095
    %1099 = vrot.lane.b32.xlu0 %v1097, 32
    %v1100 = vpop.permute.xlu0 %1099
    %v1102 = vadd.f32 %v1092, %v1100
    %v1103 = vtanh.pop %v1102
    %1105 = vrot.lane.b32.xlu0 %v1103, 64
    %v1106 = vpop.permute.xlu0 %1105
    %v1108 = vmul.f32 %v1087, %v1106
    %v1109 = vpack.c.bf16 %v1108, %v1108
    %v1111 = vshrl.u32 %v1109, 16
    %v1113 = vrot.slane %v1111, 1
    %1114 = vrot.lane.b32.xlu0 %v1113, 32
    %v1115 = vpop.permute.xlu0 %1114
    %v1117 = vsel %vm103, %v1115, 0
    %1119 = vmatprep.subr.bf16.mxu0 0
    %1120 = vmatpush1.bf16.msra.mxu0 0
    %1121 = vmatprep.subr.bf16.mxu0 0
    %1122 = vmatpush1.bf16.msra.mxu0 0
    %1123 = vmatprep.subr.bf16.mxu0 0
    %1124 = vmatpush1.bf16.msra.mxu0 0
    %1125 = vmatprep.subr.bf16.mxu0 0
    %1126 = vmatpush1.bf16.msra.mxu0 0
    %1127 = vmatprep.subr.bf16.mxu0 0
    %1128 = vmatpush1.bf16.msra.mxu0 0
    %1129 = vmatprep.subr.bf16.mxu0 0
    %1130 = vmatpush1.bf16.msra.mxu0 0
    %1131 = vmatprep.subr.bf16.mxu0 0
    %1132 = vmatpush1.bf16.msra.mxu0 %v754
    %1133 = vmatprep.subr.bf16.mxu0 0
    %1134 = vmatpush1.bf16.msra.mxu0 %v753
    %1135 = vmatprep.subr.bf16.mxu0 0
    %1136 = vmatpush2.bf16.msra.mxu0 0
    %1137 = vmatprep.subr.bf16.mxu0 0
    %1138 = vmatpush2.bf16.msra.mxu0 0
    %1139 = vmatprep.subr.bf16.mxu0 0
    %1140 = vmatpush2.bf16.msra.mxu0 0
    %1141 = vmatprep.subr.bf16.mxu0 0
    %1142 = vmatpush2.bf16.msra.mxu0 0
    %1143 = vmatprep.subr.bf16.mxu0 0
    %1144 = vmatpush2.bf16.msra.mxu0 0
    %1145 = vmatprep.subr.bf16.mxu0 0
    %1146 = vmatpush2.bf16.msra.mxu0 0
    %1147 = vmatprep.subr.bf16.mxu0 0
    %1148 = vmatpush2.bf16.msra.mxu0 0
    %1149 = vmatprep.subr.bf16.mxu0 0
    %1150 = vmatpush2.bf16.msra.mxu0 0
    %1151 = vmatprep.mubr.bf16.mxu0 0
    %1152 = vmatmul.mubr.bf16.gmra.mxu0 %v1117
    %v1153 = vpop.f32.mrf.mxu0
    %v1154 = vadd.f32 0.0, %v1153
    %v1155 = vpop.f32.mrf.mxu0
    %v1156 = vpop.f32.mrf.mxu0
    %v1157 = vpop.f32.mrf.mxu0
    %1158 = vdwg.mxu0
    %v1160 = vrot.slane %v1154, 4
    %v1162 = vadd.f32 %v802, %v1160
    %v1163 = vxor.u32 %v1162, 2147483648
    %v1164 = vmul.f32 %v1163, 1.442695
    %v1165 = vpow.pop %v1164
    %v1166 = vadd.f32 %v1165, 1.0
    %v1167 = vrcp.pop %v1166
    %v1168 = vmul.f32 1.0, %v1167
    %v1169 = vtanh.pop %v1162
    %v1171 = vrot.slane %v1102, 7
    %v1173 = vmul.f32 %v1168, %v1171
    %1175 = vrot.lane.b32.xlu0 %v1169, 64
    %v1176 = vpop.permute.xlu0 %1175
    %v1178 = vmul.f32 %v1168, %v1176
    %1180 = vrot.lane.b32.xlu0 %v1178, 32
    %v1181 = vpop.permute.xlu0 %1180
    %v1183 = vadd.f32 %v1173, %v1181
    %v1184 = vtanh.pop %v1183
    %1186 = vrot.lane.b32.xlu0 %v1184, 64
    %v1187 = vpop.permute.xlu0 %1186
    %v1189 = vmul.f32 %v1168, %v1187
    %v1190 = vpack.c.bf16 %v1189, %v1189
    %v1192 = vrot.slane %v1190, 2
    %1193 = vrot.lane.b32.xlu0 %v1192, 32
    %v1194 = vpop.permute.xlu0 %1193
    %v1196 = vsel %vm103, %v1194, 0
    %1198 = vmatprep.subr.bf16.mxu0 0
    %1199 = vmatpush1.bf16.msra.mxu0 0
    %1200 = vmatprep.subr.bf16.mxu0 0
    %1201 = vmatpush1.bf16.msra.mxu0 0
    %1202 = vmatprep.subr.bf16.mxu0 0
    %1203 = vmatpush1.bf16.msra.mxu0 0
    %1204 = vmatprep.subr.bf16.mxu0 0
    %1205 = vmatpush1.bf16.msra.mxu0 0
    %1206 = vmatprep.subr.bf16.mxu0 0
    %1207 = vmatpush1.bf16.msra.mxu0 0
    %1208 = vmatprep.subr.bf16.mxu0 0
    %1209 = vmatpush1.bf16.msra.mxu0 0
    %1210 = vmatprep.subr.bf16.mxu0 0
    %1211 = vmatpush1.bf16.msra.mxu0 %v754
    %1212 = vmatprep.subr.bf16.mxu0 0
    %1213 = vmatpush1.bf16.msra.mxu0 %v753
    %1214 = vmatprep.subr.bf16.mxu0 0
    %1215 = vmatpush2.bf16.msra.mxu0 0
    %1216 = vmatprep.subr.bf16.mxu0 0
    %1217 = vmatpush2.bf16.msra.mxu0 0
    %1218 = vmatprep.subr.bf16.mxu0 0
    %1219 = vmatpush2.bf16.msra.mxu0 0
    %1220 = vmatprep.subr.bf16.mxu0 0
    %1221 = vmatpush2.bf16.msra.mxu0 0
    %1222 = vmatprep.subr.bf16.mxu0 0
    %1223 = vmatpush2.bf16.msra.mxu0 0
    %1224 = vmatprep.subr.bf16.mxu0 0
    %1225 = vmatpush2.bf16.msra.mxu0 0
    %1226 = vmatprep.subr.bf16.mxu0 0
    %1227 = vmatpush2.bf16.msra.mxu0 0
    %1228 = vmatprep.subr.bf16.mxu0 0
    %1229 = vmatpush2.bf16.msra.mxu0 0
    %1230 = vmatprep.mubr.bf16.mxu0 0
    %1231 = vmatmul.mubr.bf16.gmra.mxu0 %v1196
    %v1232 = vpop.f32.mrf.mxu0
    %v1233 = vadd.f32 0.0, %v1232
    %v1234 = vpop.f32.mrf.mxu0
    %v1235 = vpop.f32.mrf.mxu0
    %v1236 = vpop.f32.mrf.mxu0
    %1237 = vdwg.mxu0
    %v1239 = vrot.slane %v1233, 3
    %v1241 = vadd.f32 %v802, %v1239
    %v1242 = vxor.u32 %v1241, 2147483648
    %v1243 = vmul.f32 %v1242, 1.442695
    %v1244 = vpow.pop %v1243
    %v1245 = vadd.f32 %v1244, 1.0
    %v1246 = vrcp.pop %v1245
    %v1247 = vmul.f32 1.0, %v1246
    %v1248 = vtanh.pop %v1241
    %v1250 = vrot.slane %v1183, 7
    %v1252 = vmul.f32 %v1247, %v1250
    %1254 = vrot.lane.b32.xlu0 %v1248, 64
    %v1255 = vpop.permute.xlu0 %1254
    %v1257 = vmul.f32 %v1247, %v1255
    %1259 = vrot.lane.b32.xlu0 %v1257, 32
    %v1260 = vpop.permute.xlu0 %1259
    %v1262 = vadd.f32 %v1252, %v1260
    %v1263 = vtanh.pop %v1262
    %1265 = vrot.lane.b32.xlu0 %v1263, 64
    %v1266 = vpop.permute.xlu0 %1265
    %v1268 = vmul.f32 %v1247, %v1266
    %v1269 = vpack.c.bf16 %v1268, %v1268
    %v1271 = vshrl.u32 %v1269, 16
    %v1273 = vrot.slane %v1271, 2
    %1274 = vrot.lane.b32.xlu0 %v1273, 32
    %v1275 = vpop.permute.xlu0 %1274
    %v1277 = vsel %vm103, %v1275, 0
    %1279 = vmatprep.subr.bf16.mxu0 0
    %1280 = vmatpush1.bf16.msra.mxu0 0
    %1281 = vmatprep.subr.bf16.mxu0 0
    %1282 = vmatpush1.bf16.msra.mxu0 0
    %1283 = vmatprep.subr.bf16.mxu0 0
    %1284 = vmatpush1.bf16.msra.mxu0 0
    %1285 = vmatprep.subr.bf16.mxu0 0
    %1286 = vmatpush1.bf16.msra.mxu0 0
    %1287 = vmatprep.subr.bf16.mxu0 0
    %1288 = vmatpush1.bf16.msra.mxu0 0
    %1289 = vmatprep.subr.bf16.mxu0 0
    %1290 = vmatpush1.bf16.msra.mxu0 0
    %1291 = vmatprep.subr.bf16.mxu0 0
    %1292 = vmatpush1.bf16.msra.mxu0 %v754
    %1293 = vmatprep.subr.bf16.mxu0 0
    %1294 = vmatpush1.bf16.msra.mxu0 %v753
    %1295 = vmatprep.subr.bf16.mxu0 0
    %1296 = vmatpush2.bf16.msra.mxu0 0
    %1297 = vmatprep.subr.bf16.mxu0 0
    %1298 = vmatpush2.bf16.msra.mxu0 0
    %1299 = vmatprep.subr.bf16.mxu0 0
    %1300 = vmatpush2.bf16.msra.mxu0 0
    %1301 = vmatprep.subr.bf16.mxu0 0
    %1302 = vmatpush2.bf16.msra.mxu0 0
    %1303 = vmatprep.subr.bf16.mxu0 0
    %1304 = vmatpush2.bf16.msra.mxu0 0
    %1305 = vmatprep.subr.bf16.mxu0 0
    %1306 = vmatpush2.bf16.msra.mxu0 0
    %1307 = vmatprep.subr.bf16.mxu0 0
    %1308 = vmatpush2.bf16.msra.mxu0 0
    %1309 = vmatprep.subr.bf16.mxu0 0
    %1310 = vmatpush2.bf16.msra.mxu0 0
    %1311 = vmatprep.mubr.bf16.mxu0 0
    %1312 = vmatmul.mubr.bf16.gmra.mxu0 %v1277
    %v1313 = vpop.f32.mrf.mxu0
    %v1314 = vadd.f32 0.0, %v1313
    %v1315 = vpop.f32.mrf.mxu0
    %v1316 = vpop.f32.mrf.mxu0
    %v1317 = vpop.f32.mrf.mxu0
    %1318 = vdwg.mxu0
    %v1320 = vrot.slane %v1314, 2
    %v1322 = vadd.f32 %v802, %v1320
    %v1323 = vxor.u32 %v1322, 2147483648
    %v1324 = vmul.f32 %v1323, 1.442695
    %v1325 = vpow.pop %v1324
    %v1326 = vadd.f32 %v1325, 1.0
    %v1327 = vrcp.pop %v1326
    %v1328 = vmul.f32 1.0, %v1327
    %v1329 = vtanh.pop %v1322
    %v1331 = vrot.slane %v1262, 7
    %v1333 = vmul.f32 %v1328, %v1331
    %1335 = vrot.lane.b32.xlu0 %v1329, 64
    %v1336 = vpop.permute.xlu0 %1335
    %v1338 = vmul.f32 %v1328, %v1336
    %1340 = vrot.lane.b32.xlu0 %v1338, 32
    %v1341 = vpop.permute.xlu0 %1340
    %v1343 = vadd.f32 %v1333, %v1341
    %v1344 = vtanh.pop %v1343
    %1346 = vrot.lane.b32.xlu0 %v1344, 64
    %v1347 = vpop.permute.xlu0 %1346
    %v1349 = vmul.f32 %v1328, %v1347
    %v1350 = vpack.c.bf16 %v1349, %v1349
    %v1352 = vrot.slane %v1350, 3
    %1353 = vrot.lane.b32.xlu0 %v1352, 32
    %v1354 = vpop.permute.xlu0 %1353
    %v1356 = vsel %vm103, %v1354, 0
    %1358 = vmatprep.subr.bf16.mxu0 0
    %1359 = vmatpush1.bf16.msra.mxu0 0
    %1360 = vmatprep.subr.bf16.mxu0 0
    %1361 = vmatpush1.bf16.msra.mxu0 0
    %1362 = vmatprep.subr.bf16.mxu0 0
    %1363 = vmatpush1.bf16.msra.mxu0 0
    %1364 = vmatprep.subr.bf16.mxu0 0
    %1365 = vmatpush1.bf16.msra.mxu0 0
    %1366 = vmatprep.subr.bf16.mxu0 0
    %1367 = vmatpush1.bf16.msra.mxu0 0
    %1368 = vmatprep.subr.bf16.mxu0 0
    %1369 = vmatpush1.bf16.msra.mxu0 0
    %1370 = vmatprep.subr.bf16.mxu0 0
    %1371 = vmatpush1.bf16.msra.mxu0 %v754
    %1372 = vmatprep.subr.bf16.mxu0 0
    %1373 = vmatpush1.bf16.msra.mxu0 %v753
    %1374 = vmatprep.subr.bf16.mxu0 0
    %1375 = vmatpush2.bf16.msra.mxu0 0
    %1376 = vmatprep.subr.bf16.mxu0 0
    %1377 = vmatpush2.bf16.msra.mxu0 0
    %1378 = vmatprep.subr.bf16.mxu0 0
    %1379 = vmatpush2.bf16.msra.mxu0 0
    %1380 = vmatprep.subr.bf16.mxu0 0
    %1381 = vmatpush2.bf16.msra.mxu0 0
    %1382 = vmatprep.subr.bf16.mxu0 0
    %1383 = vmatpush2.bf16.msra.mxu0 0
    %1384 = vmatprep.subr.bf16.mxu0 0
    %1385 = vmatpush2.bf16.msra.mxu0 0
    %1386 = vmatprep.subr.bf16.mxu0 0
    %1387 = vmatpush2.bf16.msra.mxu0 0
    %1388 = vmatprep.subr.bf16.mxu0 0
    %1389 = vmatpush2.bf16.msra.mxu0 0
    %1390 = vmatprep.mubr.bf16.mxu0 0
    %1391 = vmatmul.mubr.bf16.gmra.mxu0 %v1356
    %v1392 = vpop.f32.mrf.mxu0
    %v1393 = vadd.f32 0.0, %v1392
    %v1394 = vpop.f32.mrf.mxu0
    %v1395 = vpop.f32.mrf.mxu0
    %v1396 = vpop.f32.mrf.mxu0
    %1397 = vdwg.mxu0
    %v1399 = vrot.slane %v1393, 1
    %v1401 = vadd.f32 %v802, %v1399
    %v1402 = vxor.u32 %v1401, 2147483648
    %v1403 = vmul.f32 %v1402, 1.442695
    %v1404 = vpow.pop %v1403
    %v1405 = vadd.f32 %v1404, 1.0
    %v1406 = vrcp.pop %v1405
    %v1407 = vmul.f32 1.0, %v1406
    %v1408 = vtanh.pop %v1401
    %v1410 = vrot.slane %v1343, 7
    %v1412 = vmul.f32 %v1407, %v1410
    %1414 = vrot.lane.b32.xlu0 %v1408, 64
    %v1415 = vpop.permute.xlu0 %1414
    %v1417 = vmul.f32 %v1407, %v1415
    %1419 = vrot.lane.b32.xlu0 %v1417, 32
    %v1420 = vpop.permute.xlu0 %1419
    %v1422 = vadd.f32 %v1412, %v1420
    %v1423 = vtanh.pop %v1422
    %1425 = vrot.lane.b32.xlu0 %v1423, 64
    %v1426 = vpop.permute.xlu0 %1425
    %v1428 = vmul.f32 %v1407, %v1426
    %v1429 = vsel %vm729, %v871, %v949
    %v1430 = vsel %vm731, %v1429, %v1029
    %v1431 = vsel %vm733, %v1430, %v1108
    %v1432 = vsel %vm735, %v1431, %v1189
    %v1433 = vsel %vm737, %v1432, %v1268
    %v1434 = vsel %vm739, %v1433, %v1349
    %v1435 = vsel %vm741, %v1434, %v1428
    %v1436 = vld [vmem:[%s4] sm:$0xff]
    %v1437 = vld [vmem:[%s4 + $0x8] sm:$0xff]
    %v1438 = vld [vmem:[%s4 + $0x10] sm:$0xff]
    %v1439 = vld [vmem:[%s4 + $0x18] sm:$0xff]
    %v1440 = vpack.c.bf16 %v1437, %v1436
    %v1441 = vpack.c.bf16 %v1439, %v1438
    %v1442 = vld [vmem:[%s4 + $0x20] sm:$0x1]
    %v1443 = vpack.c.bf16 %v1435, %v1435
    %v1444 = vlaneseq
    %v1445 = vshrl.u32 %v1444, 7
    %v1446 = vsub.s32 0, %v1445
    %v1447 = vrot.slane %v1442, %v1446
    %1449 = vrot.lane.b32.xlu0 %v1443, 32
    %v1450 = vpop.permute.xlu0 %1449
    %v1452 = vsel %vm103, %v1450, 0
    %1454 = vmatprep.subr.bf16.mxu0 0
    %1455 = vmatpush1.bf16.msra.mxu0 0
    %1456 = vmatprep.subr.bf16.mxu0 0
    %1457 = vmatpush1.bf16.msra.mxu0 0
    %1458 = vmatprep.subr.bf16.mxu0 0
    %1459 = vmatpush1.bf16.msra.mxu0 0
    %1460 = vmatprep.subr.bf16.mxu0 0
    %1461 = vmatpush1.bf16.msra.mxu0 0
    %1462 = vmatprep.subr.bf16.mxu0 0
    %1463 = vmatpush1.bf16.msra.mxu0 0
    %1464 = vmatprep.subr.bf16.mxu0 0
    %1465 = vmatpush1.bf16.msra.mxu0 0
    %1466 = vmatprep.subr.bf16.mxu0 0
    %1467 = vmatpush1.bf16.msra.mxu0 %v1441
    %1468 = vmatprep.subr.bf16.mxu0 0
    %1469 = vmatpush1.bf16.msra.mxu0 %v1440
    %1470 = vmatprep.subr.bf16.mxu0 0
    %1471 = vmatpush2.bf16.msra.mxu0 0
    %1472 = vmatprep.subr.bf16.mxu0 0
    %1473 = vmatpush2.bf16.msra.mxu0 0
    %1474 = vmatprep.subr.bf16.mxu0 0
    %1475 = vmatpush2.bf16.msra.mxu0 0
    %1476 = vmatprep.subr.bf16.mxu0 0
    %1477 = vmatpush2.bf16.msra.mxu0 0
    %1478 = vmatprep.subr.bf16.mxu0 0
    %1479 = vmatpush2.bf16.msra.mxu0 0
    %1480 = vmatprep.subr.bf16.mxu0 0
    %1481 = vmatpush2.bf16.msra.mxu0 0
    %1482 = vmatprep.subr.bf16.mxu0 0
    %1483 = vmatpush2.bf16.msra.mxu0 0
    %1484 = vmatprep.subr.bf16.mxu0 0
    %1485 = vmatpush2.bf16.msra.mxu0 0
    %1486 = vmatprep.mubr.bf16.mxu0 0
    %1487 = vmatmul.mubr.bf16.gmra.mxu0 %v1452
    %v1488 = vpop.f32.mrf.mxu0
    %v1489 = vadd.f32 %v1447, %v1488
    %v1490 = vpop.f32.mrf.mxu0
    %v1491 = vpop.f32.mrf.mxu0
    %v1492 = vpop.f32.mrf.mxu0
    %1493 = vdwg.mxu0
    %1494 = vst.msk [vmem:[#allocation5] sm:$0xff] %vm103, %v1489
    // Predicated region
    $region26: #{tpu_custom_call.1} parent=1 // pred_check
      _
    $region27: #{tpu_custom_call.1} parent=1 // pred_check_branch
      %1496 = sbr.rel (0) target = $region29
    $region28: #{tpu_custom_call.1} parent=1 // pred_region
      %s1498 = ssub.s32 128, 128
      %1499 = vsyncadd [#allocation4], %s1498
      %s1501 = sshll.u32 [#allocation5], 4
      %s1502 = int_to_ptr.vmem [resolvable:$true] %s1501
      %1504 = dma.vmem_to_hbm [thread:$0]  %s1502, 128, %s5, [#allocation4]
    $region29: #{tpu_custom_call.1} parent=1 // pred_fallthru
      _
    // Predicated region
    $region30: #{tpu_custom_call.1} parent=1 // pred_check
      _
    $region31: #{tpu_custom_call.1} parent=1 // pred_check_branch
      %1506 = sbr.rel (0) target = $region33
    $region32: #{tpu_custom_call.1} parent=1 // pred_region
      %1507 = dma.done [#allocation4], 128
    $region33: #{tpu_custom_call.1} parent=1 // pred_fallthru
      _
    %1508 = vsyncpa [#allocation3], 1
    %1509 = vsyncpa [#allocation4], 1

</llo_original>
